<compile_context>
chip_gen: v7x
topology: tpu7x:2x2x1
jax: 0.10.0
libtpu: 0.0.40
codegen_flags: <defaults>
</compile_context>

<pallas_src>
import functools

import jax
import jax.numpy as jnp
from jax.experimental import pallas as pl
from jax.experimental.pallas import tpu as pltpu


def _round_up(x, m):
    return ((x + m - 1) // m) * m


# ---------------------------------------------------------------------------
# Kernel
# ---------------------------------------------------------------------------
def mlp_kernel(x_ref, w1_ref, b1_ref, w3_ref, b3_ref, w2_ref, b2_ref, o_ref,
               acc_ref):
    # x_ref: (tm, D) bf16, w1/w3: (D, th) bf16, b1/b3: (1, th) f32,
    # w2: (th, D) bf16, b2: (1, D) f32, o_ref: (tm, D) f32, acc_ref: (tm, D) f32.
    h = pl.program_id(1)

    x = x_ref[...]  # bf16 rows

    # fc1 / fc3 columns for this hidden tile; f32 accumulation on the MXU.
    h1 = jnp.dot(x, w1_ref[...], preferred_element_type=jnp.float32) + b1_ref[...]
    h3 = jnp.dot(x, w3_ref[...], preferred_element_type=jnp.float32) + b3_ref[...]

    # SwiGLU gate in f32: h1 * SiLU(h3); sigmoid goes to the EUP.
    g = h1 * (h3 * jax.nn.sigmoid(h3))

    # fc2 partial product over this hidden tile (f32 accumulation).
    partial = jnp.dot(g.astype(w2_ref.dtype), w2_ref[...],
                      preferred_element_type=jnp.float32)

    # Fold the fc2 bias into the accumulator init: saves the (tm, D) zero
    # store, the first read-modify-write, and the finalize bias add.
    @pl.when(h == 0)
    def _init():
        acc_ref[...] = partial + b2_ref[...]

    @pl.when(h > 0)
    def _accumulate():
        acc_ref[...] += partial

    @pl.when(h == pl.num_programs(1) - 1)
    def _finalize():
        # TODO(synk): training-mode dropout (cfg.dropout > 0) would use
        # pltpu.prng_seed / pltpu.prng_random_bits here; inference -> identity.
        o_ref[...] = acc_ref[...].astype(o_ref.dtype)


# ---------------------------------------------------------------------------
# Generation-aware tile / VMEM selection (all static Python)
# ---------------------------------------------------------------------------
def _tpu_vmem_and_kind():
    vmem_cap = None
    try:
        vmem_cap = int(pltpu.get_tpu_info().vmem_capacity_bytes)
    except Exception:
        pass
    kind = ""
    try:
        kind = jax.devices()[0].device_kind.lower()
    except Exception:
        pass
    if vmem_cap is None:
        if "v7" in kind:
            vmem_cap = 64 * 1024 * 1024
        elif kind:
            vmem_cap = 128 * 1024 * 1024
        else:
            vmem_cap = 64 * 1024 * 1024  # unknown chip: be conservative
    return vmem_cap, kind


def _vmem_working_bytes(tm, th, D):
    return (2 * tm * D * 2            # x tile (bf16), 2 buffers
            + 2 * 2 * D * th * 2      # W1 + W3 tiles (bf16), 2 buffers each
            + 2 * th * D * 2          # W2 tile (bf16), 2 buffers
            + 2 * 2 * th * 4          # b1 + b3 tiles (f32), 2 buffers each
            + 2 * D * 4               # b2 (f32), 2 buffers
            + 2 * tm * D * 4          # output tile (f32), 2 buffers
            + tm * D * 4)             # accumulator scratch (f32)


def _snap_th(H, target):
    """Largest multiple of 256 (MXU width on v6e/v7x) <= target dividing H."""
    t = min(target, H)
    if t >= H:
        return H
    t = max(256, (t // 256) * 256)
    while t > 256 and H % t:
        t -= 256
    return t if H % t == 0 else H


def _pick_tiles(M, D, H, tm, th):
    vmem_cap, kind = _tpu_vmem_and_kind()
    big_vmem = vmem_cap >= 100 * 1024 * 1024  # 128-MiB parts: v5e / v6e

    if tm is None:
        if not big_vmem:
            tm = 512          # v7x: ~310 flop/byte ridge, only 64 MiB VMEM
        elif "v5" in kind:
            tm = 256          # v5e: already at its ~240 flop/byte ridge
        else:
            tm = 768          # v6e: push towards its ~700 flop/byte ridge
    if th is None:
        th = 512 if not big_vmem else 1024

    # Row tile: at least 128 rows (MXU height, bf16 sublane pack), 128-aligned.
    tm_eff = min(tm, _round_up(M, 128))
    tm_eff = max(128, (tm_eff // 128) * 128)
    th_eff = _snap_th(H, th)

    # Shrink until the double-buffered working set fits the chip's budget.
    budget = min(vmem_cap - (8 << 20), 100 << 20)
    while _vmem_working_bytes(tm_eff, th_eff, D) > budget:
        if th_eff > 256 and th_eff % 512 == 0 and H % (th_eff // 2) == 0:
            th_eff //= 2
        elif tm_eff > 128:
            tm_eff = max(128, ((tm_eff // 2) // 128) * 128)
        else:
            break  # smallest legal tiling; vmem_limit will cover it below

    working = _vmem_working_bytes(tm_eff, th_eff, D)
    vmem_limit = int(min(vmem_cap - (4 << 20),
                         max(working + (4 << 20), 32 << 20)))
    return tm_eff, th_eff, vmem_limit


# ---------------------------------------------------------------------------
# Forward wrapper
# ---------------------------------------------------------------------------
@functools.partial(jax.jit, static_argnames=("tm", "th"))
def mlp_forward(x, w1, b1, w3, b3, w2, b2, *, tm=None, th=None):
    """x: (B, T, D) float32. Weights (in, out) layout, ideally pre-cast bf16."""
    B, T, D = x.shape
    H = w1.shape[1]  # 4 * D
    M = B * T

    tm_eff, th_eff, vmem_limit = _pick_tiles(M, D, H, tm, th)
    n_h = H // th_eff

    # Only the activations get a per-call cast; weights should already be bf16
    # (cast once at init).  The conditionals below are trace-time no-ops then.
    x_bf = x.reshape(M, D).astype(jnp.bfloat16)
    w1_bf = w1 if w1.dtype == jnp.bfloat16 else w1.astype(jnp.bfloat16)
    w3_bf = w3 if w3.dtype == jnp.bfloat16 else w3.astype(jnp.bfloat16)
    w2_bf = w2 if w2.dtype == jnp.bfloat16 else w2.astype(jnp.bfloat16)
    b1_2 = b1.reshape(1, H).astype(jnp.float32)
    b3_2 = b3.reshape(1, H).astype(jnp.float32)
    b2_2 = b2.reshape(1, D).astype(jnp.float32)

    # Ragged M: only tiny inputs (M < one row tile) get padded; otherwise the
    # edge block is handled by Pallas masking (no full-array pad pass).
    if M < tm_eff:
        x_bf = jnp.pad(x_bf, ((0, tm_eff - M), (0, 0)))
        M_rows = tm_eff
    else:
        M_rows = M
    n_m = pl.cdiv(M_rows, tm_eff)

    weight_bytes = ((w1_bf.size + w3_bf.size + w2_bf.size) * 2
                    + (b1_2.size + b3_2.size + b2_2.size) * 4)
    cost = pl.CostEstimate(
        flops=6 * M_rows * D * H,                # three M x D x H matmuls
        transcendentals=M_rows * H,              # sigmoid in SiLU
        bytes_accessed=x_bf.size * 2 + n_m * weight_bytes + M_rows * D * 4,
    )

    out2 = pl.pallas_call(
        mlp_kernel,
        out_shape=jax.ShapeDtypeStruct((M_rows, D), jnp.float32),
        grid_spec=pltpu.PrefetchScalarGridSpec(
            num_scalar_prefetch=0,
            grid=(n_m, n_h),
            in_specs=[
                pl.BlockSpec((tm_eff, D), lambda i, h: (i, 0)),    # x rows
                pl.BlockSpec((D, th_eff), lambda i, h: (0, h)),    # W1 tile
                pl.BlockSpec((1, th_eff), lambda i, h: (0, h)),    # b1 tile
                pl.BlockSpec((D, th_eff), lambda i, h: (0, h)),    # W3 tile
                pl.BlockSpec((1, th_eff), lambda i, h: (0, h)),    # b3 tile
                pl.BlockSpec((th_eff, D), lambda i, h: (h, 0)),    # W2 tile
                pl.BlockSpec((1, D), lambda i, h: (0, 0)),         # b2
            ],
            out_specs=pl.BlockSpec((tm_eff, D), lambda i, h: (i, 0)),
            scratch_shapes=[pltpu.VMEM((tm_eff, D), jnp.float32)],
        ),
        compiler_params=pltpu.CompilerParams(
            dimension_semantics=("parallel", "arbitrary"),
            vmem_limit_bytes=vmem_limit,
        ),
        cost_estimate=cost,
    )(x_bf, w1_bf, b1_2, w3_bf, b3_2, w2_bf, b2_2)

    if M_rows != M:
        out2 = out2[:M]
    return out2.reshape(B, T, D).astype(x.dtype)


# ---------------------------------------------------------------------------
# Reference + test
# ---------------------------------------------------------------------------
def xavier_uniform(key, shape):
    # shape = (fan_out, fan_in) in PyTorch Linear weight convention
    fan_out, fan_in = shape
    limit = (6.0 / (fan_in + fan_out)) ** 0.5
    return jax.random.uniform(key, shape, jnp.float32, -limit, limit)


def reference_mlp(x, w1, b1, w3, b3, w2, b2):
    h1 = x @ w1 + b1
    h3 = x @ w3 + b3
    g = h1 * (h3 * jax.nn.sigmoid(h3))
    return g @ w2 + b2


if __name__ == "__main__":
    # Small config: n_embd=128 (lane-dense output), hidden=512, B=2, T=8,
    # bias=True, dropout=0 (inference identity).
    n_embd = 128
    hidden = 4 * n_embd
    B, T = 2, 8

    key = jax.random.PRNGKey(0)
    kx, k1, k3, k2, kb1, kb3, kb2 = jax.random.split(key, 7)

    x = jax.random.normal(kx, (B, T, n_embd), jnp.float32)

    # PyTorch weight layout is (out_features, in_features); init there, then
    # transpose to (in, out) for the kernel's x @ W convention.
    w1_pt = xavier_uniform(k1, (hidden, n_embd))                         # fc1 (xavier)
    w3_pt = jax.random.normal(k3, (hidden, n_embd), jnp.float32) * 0.02  # fc3
    w2_pt = xavier_uniform(k2, (n_embd, hidden))                         # fc2 (xavier)
    b1 = jax.random.normal(kb1, (hidden,), jnp.float32) * 0.01
    b3 = jax.random.normal(kb3, (hidden,), jnp.float32) * 0.01
    b2 = jax.random.normal(kb2, (n_embd,), jnp.float32) * 0.01

    # Pre-cast weights to bf16 ONCE (parameter-init time), matching the
    # kernel's MXU operand dtype; no per-forward weight cast passes.
    w1 = w1_pt.T.astype(jnp.bfloat16)  # (n_embd, hidden)
    w3 = w3_pt.T.astype(jnp.bfloat16)  # (n_embd, hidden)
    w2 = w2_pt.T.astype(jnp.bfloat16)  # (hidden, n_embd)

    out = mlp_forward(x, w1, b1, w3, b3, w2, b2)
    out = jax.block_until_ready(out)

    # Reference uses the same bf16-rounded weights upcast to f32, so the
    # comparison isolates kernel error (x cast + accumulation) only.
    ref = reference_mlp(x.reshape(-1, n_embd),
                        w1.astype(jnp.float32), b1,
                        w3.astype(jnp.float32), b3,
                        w2.astype(jnp.float32), b2)
    ref = ref.reshape(B, T, n_embd)
    assert out.shape == (B, T, n_embd)
    # bf16 MXU inputs with f32 accumulation vs f32 reference -> relaxed tolerance.
    assert jnp.allclose(out, ref, atol=2e-2, rtol=2e-2), "mismatch vs JAX reference"

    print("KERNEL_OK")
</pallas_src>

<mosaic_0001>
module attributes {stable_mosaic.version = 11 : i64} {
  func.func @mlp_kernel(%arg0: i32, %arg1: i32, %arg2: memref<128x128xbf16, #tpu.memory_space<vmem>>, %arg3: memref<128x512xbf16, #tpu.memory_space<vmem>>, %arg4: memref<1x512xf32, #tpu.memory_space<vmem>>, %arg5: memref<128x512xbf16, #tpu.memory_space<vmem>>, %arg6: memref<1x512xf32, #tpu.memory_space<vmem>>, %arg7: memref<512x128xbf16, #tpu.memory_space<vmem>>, %arg8: memref<1x128xf32, #tpu.memory_space<vmem>>, %arg9: memref<128x128xf32, #tpu.memory_space<vmem>>, %arg10: memref<128x128xf32, #tpu.memory_space<vmem>>) attributes {dimension_semantics = [#tpu.dimension_semantics<parallel>, #tpu.dimension_semantics<arbitrary>], iteration_bounds = array<i64: 1, 1>, scalar_prefetch = 0 : i64, scratch_operands = 1 : i64, tpu.core_type = #tpu.core_type<tc>, window_params = [{transform_indices = @transform_0, window_bounds = array<i64: 128, 128>}, {transform_indices = @transform_1, window_bounds = array<i64: 128, 512>}, {transform_indices = @transform_2, window_bounds = array<i64: 1, 512>}, {transform_indices = @transform_3, window_bounds = array<i64: 128, 512>}, {transform_indices = @transform_4, window_bounds = array<i64: 1, 512>}, {transform_indices = @transform_5, window_bounds = array<i64: 512, 128>}, {pipeline_mode = #tpu.pipeline_mode<synchronous>, transform_indices = @transform_6, window_bounds = array<i64: 1, 128>}, {transform_indices = @transform_7, window_bounds = array<i64: 128, 128>}]} {
    %c0 = arith.constant 0 : index
    %c0_0 = arith.constant 0 : index
    %0 = vector.load %arg2[%c0, %c0_0] : memref<128x128xbf16, #tpu.memory_space<vmem>>, vector<128x128xbf16>
    %c0_1 = arith.constant 0 : index
    %c0_2 = arith.constant 0 : index
    %1 = vector.load %arg3[%c0_1, %c0_2] : memref<128x512xbf16, #tpu.memory_space<vmem>>, vector<128x512xbf16>
    %cst = arith.constant dense<0.000000e+00> : vector<128x512xf32>
    %2 = tpu.matmul %0, %1, %cst {dimension_numbers = #tpu.dot_dimension_numbers<[1], [0], [0], [1], [0, 0, 1, 1], [], []>} : vector<128x128xbf16>, vector<128x512xbf16>, vector<128x512xf32> -> vector<128x512xf32>
    %c0_3 = arith.constant 0 : index
    %c0_4 = arith.constant 0 : index
    %3 = vector.load %arg4[%c0_3, %c0_4] : memref<1x512xf32, #tpu.memory_space<vmem>>, vector<1x512xf32>
    %4 = vector.broadcast %3 : vector<1x512xf32> to vector<128x512xf32>
    %5 = arith.addf %2, %4 : vector<128x512xf32>
    %c0_5 = arith.constant 0 : index
    %c0_6 = arith.constant 0 : index
    %6 = vector.load %arg5[%c0_5, %c0_6] : memref<128x512xbf16, #tpu.memory_space<vmem>>, vector<128x512xbf16>
    %cst_7 = arith.constant dense<0.000000e+00> : vector<128x512xf32>
    %7 = tpu.matmul %0, %6, %cst_7 {dimension_numbers = #tpu.dot_dimension_numbers<[1], [0], [0], [1], [0, 0, 1, 1], [], []>} : vector<128x128xbf16>, vector<128x512xbf16>, vector<128x512xf32> -> vector<128x512xf32>
    %c0_8 = arith.constant 0 : index
    %c0_9 = arith.constant 0 : index
    %8 = vector.load %arg6[%c0_8, %c0_9] : memref<1x512xf32, #tpu.memory_space<vmem>>, vector<1x512xf32>
    %9 = vector.broadcast %8 : vector<1x512xf32> to vector<128x512xf32>
    %10 = arith.addf %7, %9 : vector<128x512xf32>
    %11 = arith.negf %10 : vector<128x512xf32>
    %12 = math.exp %11 : vector<128x512xf32>
    %cst_10 = arith.constant 1.000000e+00 : f32
    %13 = vector.broadcast %cst_10 : f32 to vector<128x512xf32>
    %14 = arith.addf %13, %12 : vector<128x512xf32>
    %15 = arith.divf %13, %14 : vector<128x512xf32>
    %16 = arith.mulf %10, %15 : vector<128x512xf32>
    %17 = arith.mulf %5, %16 : vector<128x512xf32>
    %18 = arith.truncf %17 : vector<128x512xf32> to vector<128x512xbf16>
    %c0_11 = arith.constant 0 : index
    %c0_12 = arith.constant 0 : index
    %19 = vector.load %arg7[%c0_11, %c0_12] : memref<512x128xbf16, #tpu.memory_space<vmem>>, vector<512x128xbf16>
    %cst_13 = arith.constant dense<0.000000e+00> : vector<128x128xf32>
    %20 = tpu.matmul %18, %19, %cst_13 {dimension_numbers = #tpu.dot_dimension_numbers<[1], [0], [0], [1], [0, 0, 1, 1], [], []>} : vector<128x512xbf16>, vector<512x128xbf16>, vector<128x128xf32> -> vector<128x128xf32>
    %c0_i32 = arith.constant 0 : i32
    %21 = arith.cmpi eq, %arg1, %c0_i32 : i32
    %22 = arith.extui %21 : i1 to i32
    %c0_i32_14 = arith.constant 0 : i32
    %23 = arith.cmpi ne, %22, %c0_i32_14 : i32
    scf.if %23 {
      %c0_19 = arith.constant 0 : index
      %c0_20 = arith.constant 0 : index
      %30 = vector.load %arg8[%c0_19, %c0_20] : memref<1x128xf32, #tpu.memory_space<vmem>>, vector<1x128xf32>
      %31 = vector.broadcast %30 : vector<1x128xf32> to vector<128x128xf32>
      %32 = arith.addf %20, %31 : vector<128x128xf32>
      %c0_21 = arith.constant 0 : index
      %c0_22 = arith.constant 0 : index
      %33 = vector.load %arg10[%c0_21, %c0_22] : memref<128x128xf32, #tpu.memory_space<vmem>>, vector<128x128xf32>
      tpu.vector_store %arg10[%c0_21, %c0_22], %32 {strides = array<i32>} : memref<128x128xf32, #tpu.memory_space<vmem>>, vector<128x128xf32>,
    } else {
    }
    %c0_i32_15 = arith.constant 0 : i32
    %24 = arith.cmpi sgt, %arg1, %c0_i32_15 : i32
    %25 = arith.extui %24 : i1 to i32
    %c0_i32_16 = arith.constant 0 : i32
    %26 = arith.cmpi ne, %25, %c0_i32_16 : i32
    scf.if %26 {
      %c0_19 = arith.constant 0 : index
      %c0_20 = arith.constant 0 : index
      %30 = vector.load %arg10[%c0_19, %c0_20] : memref<128x128xf32, #tpu.memory_space<vmem>>, vector<128x128xf32>
      %31 = arith.addf %30, %20 : vector<128x128xf32>
      %c0_21 = arith.constant 0 : index
      %c0_22 = arith.constant 0 : index
      %32 = vector.load %arg10[%c0_21, %c0_22] : memref<128x128xf32, #tpu.memory_space<vmem>>, vector<128x128xf32>
      tpu.vector_store %arg10[%c0_21, %c0_22], %31 {strides = array<i32>} : memref<128x128xf32, #tpu.memory_space<vmem>>, vector<128x128xf32>,
    } else {
    }
    %c0_i32_17 = arith.constant 0 : i32
    %27 = arith.cmpi eq, %arg1, %c0_i32_17 : i32
    %28 = arith.extui %27 : i1 to i32
    %c0_i32_18 = arith.constant 0 : i32
    %29 = arith.cmpi ne, %28, %c0_i32_18 : i32
    scf.if %29 {
      %c0_19 = arith.constant 0 : index
      %c0_20 = arith.constant 0 : index
      %30 = vector.load %arg10[%c0_19, %c0_20] : memref<128x128xf32, #tpu.memory_space<vmem>>, vector<128x128xf32>
      %c0_21 = arith.constant 0 : index
      %c0_22 = arith.constant 0 : index
      %31 = vector.load %arg9[%c0_21, %c0_22] : memref<128x128xf32, #tpu.memory_space<vmem>>, vector<128x128xf32>
      tpu.vector_store %arg9[%c0_21, %c0_22], %30 {strides = array<i32>} : memref<128x128xf32, #tpu.memory_space<vmem>>, vector<128x128xf32>,
    } else {
    }
    return
  }
  func.func @transform_0(%arg0: i32, %arg1: i32) -> (i32, i32) {
    %c0_i32 = arith.constant 0 : i32
    %c0_i32_0 = arith.constant 0 : i32
    return %arg0, %c0_i32 : i32, i32
  }
  func.func @transform_1(%arg0: i32, %arg1: i32) -> (i32, i32) {
    %c0_i32 = arith.constant 0 : i32
    %c0_i32_0 = arith.constant 0 : i32
    return %c0_i32, %arg1 : i32, i32
  }
  func.func @transform_2(%arg0: i32, %arg1: i32) -> (i32, i32) {
    %c0_i32 = arith.constant 0 : i32
    %c0_i32_0 = arith.constant 0 : i32
    return %c0_i32, %arg1 : i32, i32
  }
  func.func @transform_3(%arg0: i32, %arg1: i32) -> (i32, i32) {
    %c0_i32 = arith.constant 0 : i32
    %c0_i32_0 = arith.constant 0 : i32
    return %c0_i32, %arg1 : i32, i32
  }
  func.func @transform_4(%arg0: i32, %arg1: i32) -> (i32, i32) {
    %c0_i32 = arith.constant 0 : i32
    %c0_i32_0 = arith.constant 0 : i32
    return %c0_i32, %arg1 : i32, i32
  }
  func.func @transform_5(%arg0: i32, %arg1: i32) -> (i32, i32) {
    %c0_i32 = arith.constant 0 : i32
    %c0_i32_0 = arith.constant 0 : i32
    return %arg1, %c0_i32 : i32, i32
  }
  func.func @transform_6(%arg0: i32, %arg1: i32) -> (i32, i32) {
    %c0_i32 = arith.constant 0 : i32
    %c0_i32_0 = arith.constant 0 : i32
    %c0_i32_1 = arith.constant 0 : i32
    return %c0_i32, %c0_i32_0 : i32, i32
  }
  func.func @transform_7(%arg0: i32, %arg1: i32) -> (i32, i32) {
    %c0_i32 = arith.constant 0 : i32
    %c0_i32_0 = arith.constant 0 : i32
    return %arg0, %c0_i32 : i32, i32
  }
}

</mosaic_0001>

<llo_original>
// kernel: mlp_forward.1
$region0: #{mlp_forward.1}
  #allocation0 [shape = 'u32[]', space=smem, size = 0x4, offset = 0x4, fixed_abs, tag = 'smem constant byte address 0x4 - core index']
  #allocation1 [shape = 'u32[144,128]{1,0:T(1,128)}', space=vmem, size = 0x12000, scoped, tag = 'internal scratch']
  #allocation2 [shape = 'f32[128,128]{1,0:T(8,128)}', space=vmem, size = 0x10000, scoped, tag = 'scratch operand']
  %s0 = inlined_call_operand.vmem [shape: bf16[128,128], index: 0, kind: input, shape index: {}]
  %s1 = inlined_call_operand.hbm [shape: bf16[128,512], index: 1, kind: input, shape index: {}]
  %s2 = inlined_call_operand.vmem [shape: f32[1,512], index: 2, kind: input, shape index: {}]
  %s3 = inlined_call_operand.hbm [shape: bf16[128,512], index: 3, kind: input, shape index: {}]
  %s4 = inlined_call_operand.vmem [shape: f32[1,512], index: 4, kind: input, shape index: {}]
  %s5 = inlined_call_operand.hbm [shape: bf16[512,128], index: 5, kind: input, shape index: {}]
  %s6 = inlined_call_operand.vmem [shape: f32[1,128], index: 6, kind: input, shape index: {}]
  %s7 = inlined_call_operand.vmem [shape: f32[128,128], index: 7, kind: output, shape index: {}]
  %s8 = sld [smem:[#allocation0]]
  $region62: #{mlp_forward.1} parent=0
    _
  %s10 = ssub.s32 1, %s8
  %s11 = scalar_select 0, %s10, %s8
  $region1: #{mlp_forward.1} parent=0
    #allocation3 [shape = 'u8[131072]{0}', space=vmem, size = 0x20000, scoped, tag = 'input window, operand 1, single buffered']
    #allocation4 [shape = 's32[1]{0}', space=sflag, size = 0x4, scoped, tag = 'scoped memory for mlp_forward.1']
    #allocation5 [shape = 'u8[131072]{0}', space=vmem, size = 0x20000, scoped, tag = 'input window, operand 3, single buffered']
    #allocation6 [shape = 's32[1]{0}', space=sflag, size = 0x4, scoped, tag = 'scoped memory for mlp_forward.1']
    #allocation7 [shape = 'u8[131072]{0}', space=vmem, size = 0x20000, scoped, tag = 'input window, operand 5, single buffered']
    %12 = vsyncpa [#allocation4], 0
    %13 = vsyncpa [#allocation6], 0
    // Predicated region
    $region2: #{mlp_forward.1} parent=1 // pred_check
      _
    $region3: #{mlp_forward.1} parent=1 // pred_check_branch
      %15 = sbr.rel (0) target = $region5
    $region4: #{mlp_forward.1} parent=1 // pred_region
      _
    $region5: #{mlp_forward.1} parent=1 // pred_fallthru
      _
    // Predicated region
    $region6: #{mlp_forward.1} parent=1 // pred_check
      _
    $region7: #{mlp_forward.1} parent=1 // pred_check_branch
      %17 = sbr.rel (0) target = $region9
    $region8: #{mlp_forward.1} parent=1 // pred_region
      %s19 = ssub.s32 4096, 4096
      %20 = vsyncadd [#allocation4], %s19
      %s21 = sshll.u32 [#allocation3], 4
      %s22 = int_to_ptr.vmem [resolvable:$true] %s21
      %27 = dma.hbm_to_vmem [thread:$0]  %s1, 4096, %s22, [#allocation4], 256, 256, 16
    $region9: #{mlp_forward.1} parent=1 // pred_fallthru
      _
    // Predicated region
    $region10: #{mlp_forward.1} parent=1 // pred_check
      _
    $region11: #{mlp_forward.1} parent=1 // pred_check_branch
      %29 = sbr.rel (0) target = $region13
    $region12: #{mlp_forward.1} parent=1 // pred_region
      _
    $region13: #{mlp_forward.1} parent=1 // pred_fallthru
      _
    // Predicated region
    $region14: #{mlp_forward.1} parent=1 // pred_check
      _
    $region15: #{mlp_forward.1} parent=1 // pred_check_branch
      %31 = sbr.rel (0) target = $region17
    $region16: #{mlp_forward.1} parent=1 // pred_region
      %s33 = ssub.s32 4096, 4096
      %34 = vsyncadd [#allocation6], %s33
      %s35 = sshll.u32 [#allocation5], 4
      %s36 = int_to_ptr.vmem [resolvable:$true] %s35
      %41 = dma.hbm_to_vmem [thread:$0]  %s3, 4096, %s36, [#allocation6], 256, 256, 16
    $region17: #{mlp_forward.1} parent=1 // pred_fallthru
      _
    // Predicated region
    $region18: #{mlp_forward.1} parent=1 // pred_check
      _
    $region19: #{mlp_forward.1} parent=1 // pred_check_branch
      %43 = sbr.rel (0) target = $region21
    $region20: #{mlp_forward.1} parent=1 // pred_region
      _
    $region21: #{mlp_forward.1} parent=1 // pred_fallthru
      _
    // Predicated region
    $region22: #{mlp_forward.1} parent=1 // pred_check
      _
    $region23: #{mlp_forward.1} parent=1 // pred_check_branch
      %45 = sbr.rel (0) target = $region25
    $region24: #{mlp_forward.1} parent=1 // pred_region
      %s47 = ssub.s32 4096, 4096
      %48 = vsyncadd [#allocation6], %s47
      %s49 = sshll.u32 [#allocation7], 4
      %s50 = int_to_ptr.vmem [resolvable:$true] %s49
      %55 = dma.hbm_to_vmem [thread:$0]  %s5, 4096, %s50, [#allocation6], 64, 64, 4
    $region25: #{mlp_forward.1} parent=1 // pred_fallthru
      _
    // Predicated region
    $region26: #{mlp_forward.1} parent=1 // pred_check
      _
    $region27: #{mlp_forward.1} parent=1 // pred_check_branch
      %57 = sbr.rel (0) target = $region29
    $region28: #{mlp_forward.1} parent=1 // pred_region
      _
    $region29: #{mlp_forward.1} parent=1 // pred_fallthru
      _
    // Predicated region
    $region30: #{mlp_forward.1} parent=1 // pred_check
      _
    $region31: #{mlp_forward.1} parent=1 // pred_check_branch
      %59 = sbr.rel (0) target = $region33
    $region32: #{mlp_forward.1} parent=1 // pred_region
      %60 = dma.done [#allocation4], 4096
    $region33: #{mlp_forward.1} parent=1 // pred_fallthru
      _
    // Predicated region
    $region34: #{mlp_forward.1} parent=1 // pred_check
      _
    $region35: #{mlp_forward.1} parent=1 // pred_check_branch
      %62 = sbr.rel (0) target = $region37
    $region36: #{mlp_forward.1} parent=1 // pred_region
      %63 = dma.done [#allocation6], 4096
    $region37: #{mlp_forward.1} parent=1 // pred_fallthru
      _
    // Predicated region
    $region38: #{mlp_forward.1} parent=1 // pred_check
      _
    $region39: #{mlp_forward.1} parent=1 // pred_check_branch
      %65 = sbr.rel (0) target = $region41
    $region40: #{mlp_forward.1} parent=1 // pred_region
      %66 = dma.done [#allocation6], 4096
    $region41: #{mlp_forward.1} parent=1 // pred_fallthru
      _
    %v68 = vld [vmem:[%s0] sm:$0xf]
    %v69 = vld [vmem:[%s0 + $0x4] sm:$0xf]
    %v70 = vld [vmem:[%s0 + $0x8] sm:$0xf]
    %v71 = vld [vmem:[%s0 + $0xc] sm:$0xf]
    %v72 = vld [vmem:[%s0 + $0x10] sm:$0xf]
    %v73 = vld [vmem:[%s0 + $0x14] sm:$0xf]
    %v74 = vld [vmem:[%s0 + $0x18] sm:$0xf]
    %v75 = vld [vmem:[%s0 + $0x1c] sm:$0xf]
    %v76 = vld [vmem:[%s0 + $0x20] sm:$0xf]
    %v77 = vld [vmem:[%s0 + $0x24] sm:$0xf]
    %v78 = vld [vmem:[%s0 + $0x28] sm:$0xf]
    %v79 = vld [vmem:[%s0 + $0x2c] sm:$0xf]
    %v80 = vld [vmem:[%s0 + $0x30] sm:$0xf]
    %v81 = vld [vmem:[%s0 + $0x34] sm:$0xf]
    %v82 = vld [vmem:[%s0 + $0x38] sm:$0xf]
    %v83 = vld [vmem:[%s0 + $0x3c] sm:$0xf]
    %v84 = vld [vmem:[#allocation3] sm:$0xff]
    %v85 = vld [vmem:[#allocation3 + $0x8] sm:$0xff]
    %v86 = vld [vmem:[#allocation3 + $0x10] sm:$0xff]
    %v87 = vld [vmem:[#allocation3 + $0x18] sm:$0xff]
    %v88 = vld [vmem:[#allocation3 + $0x20] sm:$0xff]
    %v89 = vld [vmem:[#allocation3 + $0x28] sm:$0xff]
    %v90 = vld [vmem:[#allocation3 + $0x30] sm:$0xff]
    %v91 = vld [vmem:[#allocation3 + $0x38] sm:$0xff]
    %v92 = vld [vmem:[#allocation3 + $0x40] sm:$0xff]
    %v93 = vld [vmem:[#allocation3 + $0x48] sm:$0xff]
    %v94 = vld [vmem:[#allocation3 + $0x50] sm:$0xff]
    %v95 = vld [vmem:[#allocation3 + $0x58] sm:$0xff]
    %v96 = vld [vmem:[#allocation3 + $0x60] sm:$0xff]
    %v97 = vld [vmem:[#allocation3 + $0x68] sm:$0xff]
    %v98 = vld [vmem:[#allocation3 + $0x70] sm:$0xff]
    %v99 = vld [vmem:[#allocation3 + $0x78] sm:$0xff]
    %v100 = vld [vmem:[#allocation3 + $0x80] sm:$0xff]
    %v101 = vld [vmem:[#allocation3 + $0x88] sm:$0xff]
    %v102 = vld [vmem:[#allocation3 + $0x90] sm:$0xff]
    %v103 = vld [vmem:[#allocation3 + $0x98] sm:$0xff]
    %v104 = vld [vmem:[#allocation3 + $0xa0] sm:$0xff]
    %v105 = vld [vmem:[#allocation3 + $0xa8] sm:$0xff]
    %v106 = vld [vmem:[#allocation3 + $0xb0] sm:$0xff]
    %v107 = vld [vmem:[#allocation3 + $0xb8] sm:$0xff]
    %v108 = vld [vmem:[#allocation3 + $0xc0] sm:$0xff]
    %v109 = vld [vmem:[#allocation3 + $0xc8] sm:$0xff]
    %v110 = vld [vmem:[#allocation3 + $0xd0] sm:$0xff]
    %v111 = vld [vmem:[#allocation3 + $0xd8] sm:$0xff]
    %v112 = vld [vmem:[#allocation3 + $0xe0] sm:$0xff]
    %v113 = vld [vmem:[#allocation3 + $0xe8] sm:$0xff]
    %v114 = vld [vmem:[#allocation3 + $0xf0] sm:$0xff]
    %v115 = vld [vmem:[#allocation3 + $0xf8] sm:$0xff]
    %v116 = vld [vmem:[%s2] sm:$0xf]
    %v118 = vlaneseq
    %v119 = vshrl.u32 %v118, 7
    %v120 = vsub.s32 0, %v119
    %v121 = vrot.slane %v116, %v120
    %v122 = vlaneseq
    %v123 = vshrl.u32 %v122, 7
    %v124 = vsub.s32 1, %v123
    %v125 = vrot.slane %v116, %v124
    %v126 = vlaneseq
    %v127 = vshrl.u32 %v126, 7
    %v128 = vsub.s32 2, %v127
    %v129 = vrot.slane %v116, %v128
    %v130 = vlaneseq
    %v131 = vshrl.u32 %v130, 7
    %v132 = vsub.s32 3, %v131
    %v133 = vrot.slane %v116, %v132
    %v154 = vunpack.c.l.b16 %v68
    %v155 = vunpack.c.l.b16 %v69
    %v156 = vunpack.c.l.b16 %v70
    %v157 = vunpack.c.l.b16 %v71
    %v158 = vunpack.c.l.b16 %v72
    %v159 = vunpack.c.l.b16 %v73
    %v160 = vunpack.c.l.b16 %v74
    %v161 = vunpack.c.l.b16 %v75
    %v162 = vunpack.c.l.b16 %v76
    %v163 = vunpack.c.l.b16 %v77
    %v164 = vunpack.c.l.b16 %v78
    %v165 = vunpack.c.l.b16 %v79
    %v166 = vunpack.c.l.b16 %v80
    %v167 = vunpack.c.l.b16 %v81
    %v168 = vunpack.c.l.b16 %v82
    %v169 = vunpack.c.l.b16 %v83
    %v170 = vpack.c.b16 %v155, %v154
    %v171 = vpack.c.b16 %v157, %v156
    %v172 = vpack.c.b16 %v159, %v158
    %v173 = vpack.c.b16 %v161, %v160
    %v174 = vpack.c.b16 %v163, %v162
    %v175 = vpack.c.b16 %v165, %v164
    %v176 = vpack.c.b16 %v167, %v166
    %v177 = vpack.c.b16 %v169, %v168
    %v218 = vunpack.c.l.b16 %v84
    %v219 = vunpack.c.h.b16 %v84
    %v220 = vunpack.c.l.b16 %v85
    %v221 = vunpack.c.h.b16 %v85
    %v222 = vunpack.c.l.b16 %v86
    %v223 = vunpack.c.h.b16 %v86
    %v224 = vunpack.c.l.b16 %v87
    %v225 = vunpack.c.h.b16 %v87
    %v226 = vunpack.c.l.b16 %v88
    %v227 = vunpack.c.h.b16 %v88
    %v228 = vunpack.c.l.b16 %v89
    %v229 = vunpack.c.h.b16 %v89
    %v230 = vunpack.c.l.b16 %v90
    %v231 = vunpack.c.h.b16 %v90
    %v232 = vunpack.c.l.b16 %v91
    %v233 = vunpack.c.h.b16 %v91
    %v234 = vunpack.c.l.b16 %v92
    %v235 = vunpack.c.h.b16 %v92
    %v236 = vunpack.c.l.b16 %v93
    %v237 = vunpack.c.h.b16 %v93
    %v238 = vunpack.c.l.b16 %v94
    %v239 = vunpack.c.h.b16 %v94
    %v240 = vunpack.c.l.b16 %v95
    %v241 = vunpack.c.h.b16 %v95
    %v242 = vunpack.c.l.b16 %v96
    %v243 = vunpack.c.h.b16 %v96
    %v244 = vunpack.c.l.b16 %v97
    %v245 = vunpack.c.h.b16 %v97
    %v246 = vunpack.c.l.b16 %v98
    %v247 = vunpack.c.h.b16 %v98
    %v248 = vunpack.c.l.b16 %v99
    %v249 = vunpack.c.h.b16 %v99
    %v250 = vunpack.c.l.b16 %v100
    %v251 = vunpack.c.h.b16 %v100
    %v252 = vunpack.c.l.b16 %v101
    %v253 = vunpack.c.h.b16 %v101
    %v254 = vunpack.c.l.b16 %v102
    %v255 = vunpack.c.h.b16 %v102
    %v256 = vunpack.c.l.b16 %v103
    %v257 = vunpack.c.h.b16 %v103
    %v258 = vunpack.c.l.b16 %v104
    %v259 = vunpack.c.h.b16 %v104
    %v260 = vunpack.c.l.b16 %v105
    %v261 = vunpack.c.h.b16 %v105
    %v262 = vunpack.c.l.b16 %v106
    %v263 = vunpack.c.h.b16 %v106
    %v264 = vunpack.c.l.b16 %v107
    %v265 = vunpack.c.h.b16 %v107
    %v266 = vunpack.c.l.b16 %v108
    %v267 = vunpack.c.h.b16 %v108
    %v268 = vunpack.c.l.b16 %v109
    %v269 = vunpack.c.h.b16 %v109
    %v270 = vunpack.c.l.b16 %v110
    %v271 = vunpack.c.h.b16 %v110
    %v272 = vunpack.c.l.b16 %v111
    %v273 = vunpack.c.h.b16 %v111
    %v274 = vunpack.c.l.b16 %v112
    %v275 = vunpack.c.h.b16 %v112
    %v276 = vunpack.c.l.b16 %v113
    %v277 = vunpack.c.h.b16 %v113
    %v278 = vunpack.c.l.b16 %v114
    %v279 = vunpack.c.h.b16 %v114
    %v280 = vunpack.c.l.b16 %v115
    %v281 = vunpack.c.h.b16 %v115
    %v282 = vpack.c.b16 %v222, %v218
    %v283 = vpack.c.b16 %v223, %v219
    %v284 = vpack.c.b16 %v224, %v220
    %v285 = vpack.c.b16 %v225, %v221
    %v286 = vpack.c.b16 %v230, %v226
    %v287 = vpack.c.b16 %v231, %v227
    %v288 = vpack.c.b16 %v232, %v228
    %v289 = vpack.c.b16 %v233, %v229
    %v290 = vpack.c.b16 %v238, %v234
    %v291 = vpack.c.b16 %v239, %v235
    %v292 = vpack.c.b16 %v240, %v236
    %v293 = vpack.c.b16 %v241, %v237
    %v294 = vpack.c.b16 %v246, %v242
    %v295 = vpack.c.b16 %v247, %v243
    %v296 = vpack.c.b16 %v248, %v244
    %v297 = vpack.c.b16 %v249, %v245
    %v298 = vpack.c.b16 %v254, %v250
    %v299 = vpack.c.b16 %v255, %v251
    %v300 = vpack.c.b16 %v256, %v252
    %v301 = vpack.c.b16 %v257, %v253
    %v302 = vpack.c.b16 %v262, %v258
    %v303 = vpack.c.b16 %v263, %v259
    %v304 = vpack.c.b16 %v264, %v260
    %v305 = vpack.c.b16 %v265, %v261
    %v306 = vpack.c.b16 %v270, %v266
    %v307 = vpack.c.b16 %v271, %v267
    %v308 = vpack.c.b16 %v272, %v268
    %v309 = vpack.c.b16 %v273, %v269
    %v310 = vpack.c.b16 %v278, %v274
    %v311 = vpack.c.b16 %v279, %v275
    %v312 = vpack.c.b16 %v280, %v276
    %v313 = vpack.c.b16 %v281, %v277
    %346 = vmatprep.subr.bf16.mxu0 %v283
    %347 = vmatpush1.bf16.msra.mxu0 %v282
    %348 = vmatprep.subr.bf16.mxu0 %v287
    %349 = vmatpush1.bf16.msra.mxu0 %v286
    %350 = vmatprep.subr.bf16.mxu0 %v291
    %351 = vmatpush1.bf16.msra.mxu0 %v290
    %352 = vmatprep.subr.bf16.mxu0 %v295
    %353 = vmatpush1.bf16.msra.mxu0 %v294
    %354 = vmatprep.subr.bf16.mxu0 %v299
    %355 = vmatpush1.bf16.msra.mxu0 %v298
    %356 = vmatprep.subr.bf16.mxu0 %v303
    %357 = vmatpush1.bf16.msra.mxu0 %v302
    %358 = vmatprep.subr.bf16.mxu0 %v307
    %359 = vmatpush1.bf16.msra.mxu0 %v306
    %360 = vmatprep.subr.bf16.mxu0 %v311
    %361 = vmatpush1.bf16.msra.mxu0 %v310
    %362 = vmatprep.subr.bf16.mxu0 0
    %363 = vmatpush1.bf16.msra.mxu0 0
    %364 = vmatprep.subr.bf16.mxu0 0
    %365 = vmatpush1.bf16.msra.mxu0 0
    %366 = vmatprep.subr.bf16.mxu0 0
    %367 = vmatpush1.bf16.msra.mxu0 0
    %368 = vmatprep.subr.bf16.mxu0 0
    %369 = vmatpush1.bf16.msra.mxu0 0
    %370 = vmatprep.subr.bf16.mxu0 0
    %371 = vmatpush1.bf16.msra.mxu0 0
    %372 = vmatprep.subr.bf16.mxu0 0
    %373 = vmatpush1.bf16.msra.mxu0 0
    %374 = vmatprep.subr.bf16.mxu0 0
    %375 = vmatpush1.bf16.msra.mxu0 0
    %376 = vmatprep.subr.bf16.mxu0 0
    %377 = vmatpush1.bf16.msra.mxu0 0
    %378 = vmatprep.mubr.bf16.mxu0 0
    %379 = vmatmul.mubr.bf16.gmra.mrb[0].mxu0 %v170
    %v380 = vpop.f32.mrb[0].mxu0
    %v381 = vadd.f32 %v121, %v380
    %v382 = vpop.f32.mrb[0].mxu0
    %v383 = vadd.f32 %v125, %v382
    %v384 = vpop.f32.mrb[0].mxu0
    %v385 = vadd.f32 %v121, %v384
    %v386 = vpop.f32.mrb[0].mxu0
    %v387 = vadd.f32 %v125, %v386
    %388 = vmatprep.mubr.bf16.mxu0 0
    %389 = vmatmul.mubr.bf16.gmra.mrb[0].mxu0 %v171
    %v390 = vpop.f32.mrb[0].mxu0
    %v391 = vadd.f32 %v121, %v390
    %v392 = vpop.f32.mrb[0].mxu0
    %v393 = vadd.f32 %v125, %v392
    %v394 = vpop.f32.mrb[0].mxu0
    %v395 = vadd.f32 %v121, %v394
    %v396 = vpop.f32.mrb[0].mxu0
    %v397 = vadd.f32 %v125, %v396
    %398 = vmatprep.mubr.bf16.mxu0 0
    %399 = vmatmul.mubr.bf16.gmra.mrb[0].mxu0 %v172
    %v400 = vpop.f32.mrb[0].mxu0
    %v401 = vadd.f32 %v121, %v400
    %v402 = vpop.f32.mrb[0].mxu0
    %v403 = vadd.f32 %v125, %v402
    %v404 = vpop.f32.mrb[0].mxu0
    %v405 = vadd.f32 %v121, %v404
    %v406 = vpop.f32.mrb[0].mxu0
    %v407 = vadd.f32 %v125, %v406
    %408 = vmatprep.mubr.bf16.mxu0 0
    %409 = vmatmul.mubr.bf16.gmra.mrb[0].mxu0 %v173
    %v410 = vpop.f32.mrb[0].mxu0
    %v411 = vadd.f32 %v121, %v410
    %v412 = vpop.f32.mrb[0].mxu0
    %v413 = vadd.f32 %v125, %v412
    %v414 = vpop.f32.mrb[0].mxu0
    %v415 = vadd.f32 %v121, %v414
    %v416 = vpop.f32.mrb[0].mxu0
    %v417 = vadd.f32 %v125, %v416
    %418 = vmatprep.mubr.bf16.mxu0 0
    %419 = vmatmul.mubr.bf16.gmra.mrb[0].mxu0 %v174
    %v420 = vpop.f32.mrb[0].mxu0
    %v421 = vadd.f32 %v121, %v420
    %v422 = vpop.f32.mrb[0].mxu0
    %v423 = vadd.f32 %v125, %v422
    %v424 = vpop.f32.mrb[0].mxu0
    %v425 = vadd.f32 %v121, %v424
    %v426 = vpop.f32.mrb[0].mxu0
    %v427 = vadd.f32 %v125, %v426
    %428 = vmatprep.mubr.bf16.mxu0 0
    %429 = vmatmul.mubr.bf16.gmra.mrb[0].mxu0 %v175
    %v430 = vpop.f32.mrb[0].mxu0
    %v431 = vadd.f32 %v121, %v430
    %v432 = vpop.f32.mrb[0].mxu0
    %v433 = vadd.f32 %v125, %v432
    %v434 = vpop.f32.mrb[0].mxu0
    %v435 = vadd.f32 %v121, %v434
    %v436 = vpop.f32.mrb[0].mxu0
    %v437 = vadd.f32 %v125, %v436
    %438 = vmatprep.mubr.bf16.mxu0 0
    %439 = vmatmul.mubr.bf16.gmra.mrb[0].mxu0 %v176
    %v440 = vpop.f32.mrb[0].mxu0
    %v441 = vadd.f32 %v121, %v440
    %v442 = vpop.f32.mrb[0].mxu0
    %v443 = vadd.f32 %v125, %v442
    %v444 = vpop.f32.mrb[0].mxu0
    %v445 = vadd.f32 %v121, %v444
    %v446 = vpop.f32.mrb[0].mxu0
    %v447 = vadd.f32 %v125, %v446
    %448 = vmatprep.mubr.bf16.mxu0 0
    %449 = vmatmul.mubr.bf16.gmra.mrb[0].mxu0 %v177
    %v450 = vpop.f32.mrb[0].mxu0
    %v451 = vadd.f32 %v121, %v450
    %v452 = vpop.f32.mrb[0].mxu0
    %v453 = vadd.f32 %v125, %v452
    %v454 = vpop.f32.mrb[0].mxu0
    %v455 = vadd.f32 %v121, %v454
    %v456 = vpop.f32.mrb[0].mxu0
    %v457 = vadd.f32 %v125, %v456
    %458 = vdwg.mxu0
    %459 = vmatprep.subr.bf16.mxu0 %v285
    %460 = vmatpush1.bf16.msra.mxu0 %v284
    %461 = vmatprep.subr.bf16.mxu0 %v289
    %462 = vmatpush1.bf16.msra.mxu0 %v288
    %463 = vmatprep.subr.bf16.mxu0 %v293
    %464 = vmatpush1.bf16.msra.mxu0 %v292
    %465 = vmatprep.subr.bf16.mxu0 %v297
    %466 = vmatpush1.bf16.msra.mxu0 %v296
    %467 = vmatprep.subr.bf16.mxu0 %v301
    %468 = vmatpush1.bf16.msra.mxu0 %v300
    %469 = vmatprep.subr.bf16.mxu0 %v305
    %470 = vmatpush1.bf16.msra.mxu0 %v304
    %471 = vmatprep.subr.bf16.mxu0 %v309
    %472 = vmatpush1.bf16.msra.mxu0 %v308
    %473 = vmatprep.subr.bf16.mxu0 %v313
    %474 = vmatpush1.bf16.msra.mxu0 %v312
    %475 = vmatprep.subr.bf16.mxu0 0
    %476 = vmatpush1.bf16.msra.mxu0 0
    %477 = vmatprep.subr.bf16.mxu0 0
    %478 = vmatpush1.bf16.msra.mxu0 0
    %479 = vmatprep.subr.bf16.mxu0 0
    %480 = vmatpush1.bf16.msra.mxu0 0
    %481 = vmatprep.subr.bf16.mxu0 0
    %482 = vmatpush1.bf16.msra.mxu0 0
    %483 = vmatprep.subr.bf16.mxu0 0
    %484 = vmatpush1.bf16.msra.mxu0 0
    %485 = vmatprep.subr.bf16.mxu0 0
    %486 = vmatpush1.bf16.msra.mxu0 0
    %487 = vmatprep.subr.bf16.mxu0 0
    %488 = vmatpush1.bf16.msra.mxu0 0
    %489 = vmatprep.subr.bf16.mxu0 0
    %490 = vmatpush1.bf16.msra.mxu0 0
    %491 = vmatprep.mubr.bf16.mxu0 0
    %492 = vmatmul.mubr.bf16.gmra.mrb[0].mxu0 %v170
    %v493 = vpop.f32.mrb[0].mxu0
    %v494 = vadd.f32 %v129, %v493
    %v495 = vpop.f32.mrb[0].mxu0
    %v496 = vadd.f32 %v133, %v495
    %v497 = vpop.f32.mrb[0].mxu0
    %v498 = vadd.f32 %v129, %v497
    %v499 = vpop.f32.mrb[0].mxu0
    %v500 = vadd.f32 %v133, %v499
    %501 = vmatprep.mubr.bf16.mxu0 0
    %502 = vmatmul.mubr.bf16.gmra.mrb[0].mxu0 %v171
    %v503 = vpop.f32.mrb[0].mxu0
    %v504 = vadd.f32 %v129, %v503
    %v505 = vpop.f32.mrb[0].mxu0
    %v506 = vadd.f32 %v133, %v505
    %v507 = vpop.f32.mrb[0].mxu0
    %v508 = vadd.f32 %v129, %v507
    %v509 = vpop.f32.mrb[0].mxu0
    %v510 = vadd.f32 %v133, %v509
    %511 = vmatprep.mubr.bf16.mxu0 0
    %512 = vmatmul.mubr.bf16.gmra.mrb[0].mxu0 %v172
    %v513 = vpop.f32.mrb[0].mxu0
    %v514 = vadd.f32 %v129, %v513
    %v515 = vpop.f32.mrb[0].mxu0
    %v516 = vadd.f32 %v133, %v515
    %v517 = vpop.f32.mrb[0].mxu0
    %v518 = vadd.f32 %v129, %v517
    %v519 = vpop.f32.mrb[0].mxu0
    %v520 = vadd.f32 %v133, %v519
    %521 = vmatprep.mubr.bf16.mxu0 0
    %522 = vmatmul.mubr.bf16.gmra.mrb[0].mxu0 %v173
    %v523 = vpop.f32.mrb[0].mxu0
    %v524 = vadd.f32 %v129, %v523
    %v525 = vpop.f32.mrb[0].mxu0
    %v526 = vadd.f32 %v133, %v525
    %v527 = vpop.f32.mrb[0].mxu0
    %v528 = vadd.f32 %v129, %v527
    %v529 = vpop.f32.mrb[0].mxu0
    %v530 = vadd.f32 %v133, %v529
    %531 = vmatprep.mubr.bf16.mxu0 0
    %532 = vmatmul.mubr.bf16.gmra.mrb[0].mxu0 %v174
    %v533 = vpop.f32.mrb[0].mxu0
    %v534 = vadd.f32 %v129, %v533
    %v535 = vpop.f32.mrb[0].mxu0
    %v536 = vadd.f32 %v133, %v535
    %v537 = vpop.f32.mrb[0].mxu0
    %v538 = vadd.f32 %v129, %v537
    %v539 = vpop.f32.mrb[0].mxu0
    %v540 = vadd.f32 %v133, %v539
    %541 = vmatprep.mubr.bf16.mxu0 0
    %542 = vmatmul.mubr.bf16.gmra.mrb[0].mxu0 %v175
    %v543 = vpop.f32.mrb[0].mxu0
    %v544 = vadd.f32 %v129, %v543
    %v545 = vpop.f32.mrb[0].mxu0
    %v546 = vadd.f32 %v133, %v545
    %v547 = vpop.f32.mrb[0].mxu0
    %v548 = vadd.f32 %v129, %v547
    %v549 = vpop.f32.mrb[0].mxu0
    %v550 = vadd.f32 %v133, %v549
    %551 = vmatprep.mubr.bf16.mxu0 0
    %552 = vmatmul.mubr.bf16.gmra.mrb[0].mxu0 %v176
    %v553 = vpop.f32.mrb[0].mxu0
    %v554 = vadd.f32 %v129, %v553
    %v555 = vpop.f32.mrb[0].mxu0
    %v556 = vadd.f32 %v133, %v555
    %v557 = vpop.f32.mrb[0].mxu0
    %v558 = vadd.f32 %v129, %v557
    %v559 = vpop.f32.mrb[0].mxu0
    %v560 = vadd.f32 %v133, %v559
    %561 = vmatprep.mubr.bf16.mxu0 0
    %562 = vmatmul.mubr.bf16.gmra.mrb[0].mxu0 %v177
    %v563 = vpop.f32.mrb[0].mxu0
    %v564 = vadd.f32 %v129, %v563
    %v565 = vpop.f32.mrb[0].mxu0
    %v566 = vadd.f32 %v133, %v565
    %v567 = vpop.f32.mrb[0].mxu0
    %v568 = vadd.f32 %v129, %v567
    %v569 = vpop.f32.mrb[0].mxu0
    %v570 = vadd.f32 %v133, %v569
    %571 = vdwg.mxu0
    %v572 = vld [vmem:[#allocation5] sm:$0xff]
    %v573 = vld [vmem:[#allocation5 + $0x8] sm:$0xff]
    %v574 = vld [vmem:[#allocation5 + $0x10] sm:$0xff]
    %v575 = vld [vmem:[#allocation5 + $0x18] sm:$0xff]
    %v576 = vld [vmem:[#allocation5 + $0x20] sm:$0xff]
    %v577 = vld [vmem:[#allocation5 + $0x28] sm:$0xff]
    %v578 = vld [vmem:[#allocation5 + $0x30] sm:$0xff]
    %v579 = vld [vmem:[#allocation5 + $0x38] sm:$0xff]
    %v580 = vld [vmem:[#allocation5 + $0x40] sm:$0xff]
    %v581 = vld [vmem:[#allocation5 + $0x48] sm:$0xff]
    %v582 = vld [vmem:[#allocation5 + $0x50] sm:$0xff]
    %v583 = vld [vmem:[#allocation5 + $0x58] sm:$0xff]
    %v584 = vld [vmem:[#allocation5 + $0x60] sm:$0xff]
    %v585 = vld [vmem:[#allocation5 + $0x68] sm:$0xff]
    %v586 = vld [vmem:[#allocation5 + $0x70] sm:$0xff]
    %v587 = vld [vmem:[#allocation5 + $0x78] sm:$0xff]
    %v588 = vld [vmem:[#allocation5 + $0x80] sm:$0xff]
    %v589 = vld [vmem:[#allocation5 + $0x88] sm:$0xff]
    %v590 = vld [vmem:[#allocation5 + $0x90] sm:$0xff]
    %v591 = vld [vmem:[#allocation5 + $0x98] sm:$0xff]
    %v592 = vld [vmem:[#allocation5 + $0xa0] sm:$0xff]
    %v593 = vld [vmem:[#allocation5 + $0xa8] sm:$0xff]
    %v594 = vld [vmem:[#allocation5 + $0xb0] sm:$0xff]
    %v595 = vld [vmem:[#allocation5 + $0xb8] sm:$0xff]
    %v596 = vld [vmem:[#allocation5 + $0xc0] sm:$0xff]
    %v597 = vld [vmem:[#allocation5 + $0xc8] sm:$0xff]
    %v598 = vld [vmem:[#allocation5 + $0xd0] sm:$0xff]
    %v599 = vld [vmem:[#allocation5 + $0xd8] sm:$0xff]
    %v600 = vld [vmem:[#allocation5 + $0xe0] sm:$0xff]
    %v601 = vld [vmem:[#allocation5 + $0xe8] sm:$0xff]
    %v602 = vld [vmem:[#allocation5 + $0xf0] sm:$0xff]
    %v603 = vld [vmem:[#allocation5 + $0xf8] sm:$0xff]
    %v604 = vld [vmem:[%s4] sm:$0xf]
    %v606 = vlaneseq
    %v607 = vshrl.u32 %v606, 7
    %v608 = vsub.s32 0, %v607
    %v609 = vrot.slane %v604, %v608
    %v610 = vlaneseq
    %v611 = vshrl.u32 %v610, 7
    %v612 = vsub.s32 1, %v611
    %v613 = vrot.slane %v604, %v612
    %v614 = vlaneseq
    %v615 = vshrl.u32 %v614, 7
    %v616 = vsub.s32 2, %v615
    %v617 = vrot.slane %v604, %v616
    %v618 = vlaneseq
    %v619 = vshrl.u32 %v618, 7
    %v620 = vsub.s32 3, %v619
    %v621 = vrot.slane %v604, %v620
    %v658 = vunpack.c.l.b16 %v572
    %v659 = vunpack.c.h.b16 %v572
    %v660 = vunpack.c.l.b16 %v573
    %v661 = vunpack.c.h.b16 %v573
    %v662 = vunpack.c.l.b16 %v574
    %v663 = vunpack.c.h.b16 %v574
    %v664 = vunpack.c.l.b16 %v575
    %v665 = vunpack.c.h.b16 %v575
    %v666 = vunpack.c.l.b16 %v576
    %v667 = vunpack.c.h.b16 %v576
    %v668 = vunpack.c.l.b16 %v577
    %v669 = vunpack.c.h.b16 %v577
    %v670 = vunpack.c.l.b16 %v578
    %v671 = vunpack.c.h.b16 %v578
    %v672 = vunpack.c.l.b16 %v579
    %v673 = vunpack.c.h.b16 %v579
    %v674 = vunpack.c.l.b16 %v580
    %v675 = vunpack.c.h.b16 %v580
    %v676 = vunpack.c.l.b16 %v581
    %v677 = vunpack.c.h.b16 %v581
    %v678 = vunpack.c.l.b16 %v582
    %v679 = vunpack.c.h.b16 %v582
    %v680 = vunpack.c.l.b16 %v583
    %v681 = vunpack.c.h.b16 %v583
    %v682 = vunpack.c.l.b16 %v584
    %v683 = vunpack.c.h.b16 %v584
    %v684 = vunpack.c.l.b16 %v585
    %v685 = vunpack.c.h.b16 %v585
    %v686 = vunpack.c.l.b16 %v586
    %v687 = vunpack.c.h.b16 %v586
    %v688 = vunpack.c.l.b16 %v587
    %v689 = vunpack.c.h.b16 %v587
    %v690 = vunpack.c.l.b16 %v588
    %v691 = vunpack.c.h.b16 %v588
    %v692 = vunpack.c.l.b16 %v589
    %v693 = vunpack.c.h.b16 %v589
    %v694 = vunpack.c.l.b16 %v590
    %v695 = vunpack.c.h.b16 %v590
    %v696 = vunpack.c.l.b16 %v591
    %v697 = vunpack.c.h.b16 %v591
    %v698 = vunpack.c.l.b16 %v592
    %v699 = vunpack.c.h.b16 %v592
    %v700 = vunpack.c.l.b16 %v593
    %v701 = vunpack.c.h.b16 %v593
    %v702 = vunpack.c.l.b16 %v594
    %v703 = vunpack.c.h.b16 %v594
    %v704 = vunpack.c.l.b16 %v595
    %v705 = vunpack.c.h.b16 %v595
    %v706 = vunpack.c.l.b16 %v596
    %v707 = vunpack.c.h.b16 %v596
    %v708 = vunpack.c.l.b16 %v597
    %v709 = vunpack.c.h.b16 %v597
    %v710 = vunpack.c.l.b16 %v598
    %v711 = vunpack.c.h.b16 %v598
    %v712 = vunpack.c.l.b16 %v599
    %v713 = vunpack.c.h.b16 %v599
    %v714 = vunpack.c.l.b16 %v600
    %v715 = vunpack.c.h.b16 %v600
    %v716 = vunpack.c.l.b16 %v601
    %v717 = vunpack.c.h.b16 %v601
    %v718 = vunpack.c.l.b16 %v602
    %v719 = vunpack.c.h.b16 %v602
    %v720 = vunpack.c.l.b16 %v603
    %v721 = vunpack.c.h.b16 %v603
    %v722 = vpack.c.b16 %v662, %v658
    %v723 = vpack.c.b16 %v663, %v659
    %v724 = vpack.c.b16 %v664, %v660
    %v725 = vpack.c.b16 %v665, %v661
    %v726 = vpack.c.b16 %v670, %v666
    %v727 = vpack.c.b16 %v671, %v667
    %v728 = vpack.c.b16 %v672, %v668
    %v729 = vpack.c.b16 %v673, %v669
    %v730 = vpack.c.b16 %v678, %v674
    %v731 = vpack.c.b16 %v679, %v675
    %v732 = vpack.c.b16 %v680, %v676
    %v733 = vpack.c.b16 %v681, %v677
    %v734 = vpack.c.b16 %v686, %v682
    %v735 = vpack.c.b16 %v687, %v683
    %v736 = vpack.c.b16 %v688, %v684
    %v737 = vpack.c.b16 %v689, %v685
    %v738 = vpack.c.b16 %v694, %v690
    %v739 = vpack.c.b16 %v695, %v691
    %v740 = vpack.c.b16 %v696, %v692
    %v741 = vpack.c.b16 %v697, %v693
    %v742 = vpack.c.b16 %v702, %v698
    %v743 = vpack.c.b16 %v703, %v699
    %v744 = vpack.c.b16 %v704, %v700
    %v745 = vpack.c.b16 %v705, %v701
    %v746 = vpack.c.b16 %v710, %v706
    %v747 = vpack.c.b16 %v711, %v707
    %v748 = vpack.c.b16 %v712, %v708
    %v749 = vpack.c.b16 %v713, %v709
    %v750 = vpack.c.b16 %v718, %v714
    %v751 = vpack.c.b16 %v719, %v715
    %v752 = vpack.c.b16 %v720, %v716
    %v753 = vpack.c.b16 %v721, %v717
    %786 = vmatprep.subr.bf16.mxu0 %v723
    %787 = vmatpush1.bf16.msra.mxu0 %v722
    %788 = vmatprep.subr.bf16.mxu0 %v727
    %789 = vmatpush1.bf16.msra.mxu0 %v726
    %790 = vmatprep.subr.bf16.mxu0 %v731
    %791 = vmatpush1.bf16.msra.mxu0 %v730
    %792 = vmatprep.subr.bf16.mxu0 %v735
    %793 = vmatpush1.bf16.msra.mxu0 %v734
    %794 = vmatprep.subr.bf16.mxu0 %v739
    %795 = vmatpush1.bf16.msra.mxu0 %v738
    %796 = vmatprep.subr.bf16.mxu0 %v743
    %797 = vmatpush1.bf16.msra.mxu0 %v742
    %798 = vmatprep.subr.bf16.mxu0 %v747
    %799 = vmatpush1.bf16.msra.mxu0 %v746
    %800 = vmatprep.subr.bf16.mxu0 %v751
    %801 = vmatpush1.bf16.msra.mxu0 %v750
    %802 = vmatprep.subr.bf16.mxu0 0
    %803 = vmatpush1.bf16.msra.mxu0 0
    %804 = vmatprep.subr.bf16.mxu0 0
    %805 = vmatpush1.bf16.msra.mxu0 0
    %806 = vmatprep.subr.bf16.mxu0 0
    %807 = vmatpush1.bf16.msra.mxu0 0
    %808 = vmatprep.subr.bf16.mxu0 0
    %809 = vmatpush1.bf16.msra.mxu0 0
    %810 = vmatprep.subr.bf16.mxu0 0
    %811 = vmatpush1.bf16.msra.mxu0 0
    %812 = vmatprep.subr.bf16.mxu0 0
    %813 = vmatpush1.bf16.msra.mxu0 0
    %814 = vmatprep.subr.bf16.mxu0 0
    %815 = vmatpush1.bf16.msra.mxu0 0
    %816 = vmatprep.subr.bf16.mxu0 0
    %817 = vmatpush1.bf16.msra.mxu0 0
    %818 = vmatprep.mubr.bf16.mxu0 0
    %819 = vmatmul.mubr.bf16.gmra.mrb[0].mxu0 %v170
    %v820 = vpop.f32.mrb[0].mxu0
    %v821 = vadd.f32 %v609, %v820
    %v822 = vpop.f32.mrb[0].mxu0
    %v823 = vadd.f32 %v613, %v822
    %v824 = vpop.f32.mrb[0].mxu0
    %v825 = vadd.f32 %v609, %v824
    %v826 = vpop.f32.mrb[0].mxu0
    %v827 = vadd.f32 %v613, %v826
    %828 = vmatprep.mubr.bf16.mxu0 0
    %829 = vmatmul.mubr.bf16.gmra.mrb[0].mxu0 %v171
    %v830 = vpop.f32.mrb[0].mxu0
    %v831 = vadd.f32 %v609, %v830
    %v832 = vpop.f32.mrb[0].mxu0
    %v833 = vadd.f32 %v613, %v832
    %v834 = vpop.f32.mrb[0].mxu0
    %v835 = vadd.f32 %v609, %v834
    %v836 = vpop.f32.mrb[0].mxu0
    %v837 = vadd.f32 %v613, %v836
    %838 = vmatprep.mubr.bf16.mxu0 0
    %839 = vmatmul.mubr.bf16.gmra.mrb[0].mxu0 %v172
    %v840 = vpop.f32.mrb[0].mxu0
    %v841 = vadd.f32 %v609, %v840
    %v842 = vpop.f32.mrb[0].mxu0
    %v843 = vadd.f32 %v613, %v842
    %v844 = vpop.f32.mrb[0].mxu0
    %v845 = vadd.f32 %v609, %v844
    %v846 = vpop.f32.mrb[0].mxu0
    %v847 = vadd.f32 %v613, %v846
    %848 = vmatprep.mubr.bf16.mxu0 0
    %849 = vmatmul.mubr.bf16.gmra.mrb[0].mxu0 %v173
    %v850 = vpop.f32.mrb[0].mxu0
    %v851 = vadd.f32 %v609, %v850
    %v852 = vpop.f32.mrb[0].mxu0
    %v853 = vadd.f32 %v613, %v852
    %v854 = vpop.f32.mrb[0].mxu0
    %v855 = vadd.f32 %v609, %v854
    %v856 = vpop.f32.mrb[0].mxu0
    %v857 = vadd.f32 %v613, %v856
    %858 = vmatprep.mubr.bf16.mxu0 0
    %859 = vmatmul.mubr.bf16.gmra.mrb[0].mxu0 %v174
    %v860 = vpop.f32.mrb[0].mxu0
    %v861 = vadd.f32 %v609, %v860
    %v862 = vpop.f32.mrb[0].mxu0
    %v863 = vadd.f32 %v613, %v862
    %v864 = vpop.f32.mrb[0].mxu0
    %v865 = vadd.f32 %v609, %v864
    %v866 = vpop.f32.mrb[0].mxu0
    %v867 = vadd.f32 %v613, %v866
    %868 = vmatprep.mubr.bf16.mxu0 0
    %869 = vmatmul.mubr.bf16.gmra.mrb[0].mxu0 %v175
    %v870 = vpop.f32.mrb[0].mxu0
    %v871 = vadd.f32 %v609, %v870
    %v872 = vpop.f32.mrb[0].mxu0
    %v873 = vadd.f32 %v613, %v872
    %v874 = vpop.f32.mrb[0].mxu0
    %v875 = vadd.f32 %v609, %v874
    %v876 = vpop.f32.mrb[0].mxu0
    %v877 = vadd.f32 %v613, %v876
    %878 = vmatprep.mubr.bf16.mxu0 0
    %879 = vmatmul.mubr.bf16.gmra.mrb[0].mxu0 %v176
    %v880 = vpop.f32.mrb[0].mxu0
    %v881 = vadd.f32 %v609, %v880
    %v882 = vpop.f32.mrb[0].mxu0
    %v883 = vadd.f32 %v613, %v882
    %v884 = vpop.f32.mrb[0].mxu0
    %v885 = vadd.f32 %v609, %v884
    %v886 = vpop.f32.mrb[0].mxu0
    %v887 = vadd.f32 %v613, %v886
    %888 = vmatprep.mubr.bf16.mxu0 0
    %889 = vmatmul.mubr.bf16.gmra.mrb[0].mxu0 %v177
    %v890 = vpop.f32.mrb[0].mxu0
    %v891 = vadd.f32 %v609, %v890
    %v892 = vpop.f32.mrb[0].mxu0
    %v893 = vadd.f32 %v613, %v892
    %v894 = vpop.f32.mrb[0].mxu0
    %v895 = vadd.f32 %v609, %v894
    %v896 = vpop.f32.mrb[0].mxu0
    %v897 = vadd.f32 %v613, %v896
    %898 = vdwg.mxu0
    %899 = vmatprep.subr.bf16.mxu0 %v725
    %900 = vmatpush1.bf16.msra.mxu0 %v724
    %901 = vmatprep.subr.bf16.mxu0 %v729
    %902 = vmatpush1.bf16.msra.mxu0 %v728
    %903 = vmatprep.subr.bf16.mxu0 %v733
    %904 = vmatpush1.bf16.msra.mxu0 %v732
    %905 = vmatprep.subr.bf16.mxu0 %v737
    %906 = vmatpush1.bf16.msra.mxu0 %v736
    %907 = vmatprep.subr.bf16.mxu0 %v741
    %908 = vmatpush1.bf16.msra.mxu0 %v740
    %909 = vmatprep.subr.bf16.mxu0 %v745
    %910 = vmatpush1.bf16.msra.mxu0 %v744
    %911 = vmatprep.subr.bf16.mxu0 %v749
    %912 = vmatpush1.bf16.msra.mxu0 %v748
    %913 = vmatprep.subr.bf16.mxu0 %v753
    %914 = vmatpush1.bf16.msra.mxu0 %v752
    %915 = vmatprep.subr.bf16.mxu0 0
    %916 = vmatpush1.bf16.msra.mxu0 0
    %917 = vmatprep.subr.bf16.mxu0 0
    %918 = vmatpush1.bf16.msra.mxu0 0
    %919 = vmatprep.subr.bf16.mxu0 0
    %920 = vmatpush1.bf16.msra.mxu0 0
    %921 = vmatprep.subr.bf16.mxu0 0
    %922 = vmatpush1.bf16.msra.mxu0 0
    %923 = vmatprep.subr.bf16.mxu0 0
    %924 = vmatpush1.bf16.msra.mxu0 0
    %925 = vmatprep.subr.bf16.mxu0 0
    %926 = vmatpush1.bf16.msra.mxu0 0
    %927 = vmatprep.subr.bf16.mxu0 0
    %928 = vmatpush1.bf16.msra.mxu0 0
    %929 = vmatprep.subr.bf16.mxu0 0
    %930 = vmatpush1.bf16.msra.mxu0 0
    %931 = vmatprep.mubr.bf16.mxu0 0
    %932 = vmatmul.mubr.bf16.gmra.mrb[0].mxu0 %v170
    %v933 = vpop.f32.mrb[0].mxu0
    %v934 = vadd.f32 %v617, %v933
    %v935 = vpop.f32.mrb[0].mxu0
    %v936 = vadd.f32 %v621, %v935
    %v937 = vpop.f32.mrb[0].mxu0
    %v938 = vadd.f32 %v617, %v937
    %v939 = vpop.f32.mrb[0].mxu0
    %v940 = vadd.f32 %v621, %v939
    %941 = vmatprep.mubr.bf16.mxu0 0
    %942 = vmatmul.mubr.bf16.gmra.mrb[0].mxu0 %v171
    %v943 = vpop.f32.mrb[0].mxu0
    %v944 = vadd.f32 %v617, %v943
    %v945 = vpop.f32.mrb[0].mxu0
    %v946 = vadd.f32 %v621, %v945
    %v947 = vpop.f32.mrb[0].mxu0
    %v948 = vadd.f32 %v617, %v947
    %v949 = vpop.f32.mrb[0].mxu0
    %v950 = vadd.f32 %v621, %v949
    %951 = vmatprep.mubr.bf16.mxu0 0
    %952 = vmatmul.mubr.bf16.gmra.mrb[0].mxu0 %v172
    %v953 = vpop.f32.mrb[0].mxu0
    %v954 = vadd.f32 %v617, %v953
    %v955 = vpop.f32.mrb[0].mxu0
    %v956 = vadd.f32 %v621, %v955
    %v957 = vpop.f32.mrb[0].mxu0
    %v958 = vadd.f32 %v617, %v957
    %v959 = vpop.f32.mrb[0].mxu0
    %v960 = vadd.f32 %v621, %v959
    %961 = vmatprep.mubr.bf16.mxu0 0
    %962 = vmatmul.mubr.bf16.gmra.mrb[0].mxu0 %v173
    %v963 = vpop.f32.mrb[0].mxu0
    %v964 = vadd.f32 %v617, %v963
    %v965 = vpop.f32.mrb[0].mxu0
    %v966 = vadd.f32 %v621, %v965
    %v967 = vpop.f32.mrb[0].mxu0
    %v968 = vadd.f32 %v617, %v967
    %v969 = vpop.f32.mrb[0].mxu0
    %v970 = vadd.f32 %v621, %v969
    %971 = vmatprep.mubr.bf16.mxu0 0
    %972 = vmatmul.mubr.bf16.gmra.mrb[0].mxu0 %v174
    %v973 = vpop.f32.mrb[0].mxu0
    %v974 = vadd.f32 %v617, %v973
    %v975 = vpop.f32.mrb[0].mxu0
    %v976 = vadd.f32 %v621, %v975
    %v977 = vpop.f32.mrb[0].mxu0
    %v978 = vadd.f32 %v617, %v977
    %v979 = vpop.f32.mrb[0].mxu0
    %v980 = vadd.f32 %v621, %v979
    %981 = vmatprep.mubr.bf16.mxu0 0
    %982 = vmatmul.mubr.bf16.gmra.mrb[0].mxu0 %v175
    %v983 = vpop.f32.mrb[0].mxu0
    %v984 = vadd.f32 %v617, %v983
    %v985 = vpop.f32.mrb[0].mxu0
    %v986 = vadd.f32 %v621, %v985
    %v987 = vpop.f32.mrb[0].mxu0
    %v988 = vadd.f32 %v617, %v987
    %v989 = vpop.f32.mrb[0].mxu0
    %v990 = vadd.f32 %v621, %v989
    %991 = vmatprep.mubr.bf16.mxu0 0
    %992 = vmatmul.mubr.bf16.gmra.mrb[0].mxu0 %v176
    %v993 = vpop.f32.mrb[0].mxu0
    %v994 = vadd.f32 %v617, %v993
    %v995 = vpop.f32.mrb[0].mxu0
    %v996 = vadd.f32 %v621, %v995
    %v997 = vpop.f32.mrb[0].mxu0
    %v998 = vadd.f32 %v617, %v997
    %v999 = vpop.f32.mrb[0].mxu0
    %v1000 = vadd.f32 %v621, %v999
    %1001 = vmatprep.mubr.bf16.mxu0 0
    %1002 = vmatmul.mubr.bf16.gmra.mrb[0].mxu0 %v177
    %v1003 = vpop.f32.mrb[0].mxu0
    %v1004 = vadd.f32 %v617, %v1003
    %v1005 = vpop.f32.mrb[0].mxu0
    %v1006 = vadd.f32 %v621, %v1005
    %v1007 = vpop.f32.mrb[0].mxu0
    %v1008 = vadd.f32 %v617, %v1007
    %v1009 = vpop.f32.mrb[0].mxu0
    %v1010 = vadd.f32 %v621, %v1009
    %1011 = vdwg.mxu0
    %v1012 = vxor.u32 %v821, 2147483648
    %v1013 = vxor.u32 %v823, 2147483648
    %v1014 = vxor.u32 %v934, 2147483648
    %v1015 = vxor.u32 %v936, 2147483648
    %v1016 = vxor.u32 %v825, 2147483648
    %v1017 = vxor.u32 %v827, 2147483648
    %v1018 = vxor.u32 %v938, 2147483648
    %v1019 = vxor.u32 %v940, 2147483648
    %v1020 = vxor.u32 %v831, 2147483648
    %v1021 = vxor.u32 %v833, 2147483648
    %v1022 = vxor.u32 %v944, 2147483648
    %v1023 = vxor.u32 %v946, 2147483648
    %v1024 = vxor.u32 %v835, 2147483648
    %v1025 = vxor.u32 %v837, 2147483648
    %v1026 = vxor.u32 %v948, 2147483648
    %v1027 = vxor.u32 %v950, 2147483648
    %v1028 = vxor.u32 %v841, 2147483648
    %v1029 = vxor.u32 %v843, 2147483648
    %v1030 = vxor.u32 %v954, 2147483648
    %v1031 = vxor.u32 %v956, 2147483648
    %v1032 = vxor.u32 %v845, 2147483648
    %v1033 = vxor.u32 %v847, 2147483648
    %v1034 = vxor.u32 %v958, 2147483648
    %v1035 = vxor.u32 %v960, 2147483648
    %v1036 = vxor.u32 %v851, 2147483648
    %v1037 = vxor.u32 %v853, 2147483648
    %v1038 = vxor.u32 %v964, 2147483648
    %v1039 = vxor.u32 %v966, 2147483648
    %v1040 = vxor.u32 %v855, 2147483648
    %v1041 = vxor.u32 %v857, 2147483648
    %v1042 = vxor.u32 %v968, 2147483648
    %v1043 = vxor.u32 %v970, 2147483648
    %v1044 = vxor.u32 %v861, 2147483648
    %v1045 = vxor.u32 %v863, 2147483648
    %v1046 = vxor.u32 %v974, 2147483648
    %v1047 = vxor.u32 %v976, 2147483648
    %v1048 = vxor.u32 %v865, 2147483648
    %v1049 = vxor.u32 %v867, 2147483648
    %v1050 = vxor.u32 %v978, 2147483648
    %v1051 = vxor.u32 %v980, 2147483648
    %v1052 = vxor.u32 %v871, 2147483648
    %v1053 = vxor.u32 %v873, 2147483648
    %v1054 = vxor.u32 %v984, 2147483648
    %v1055 = vxor.u32 %v986, 2147483648
    %v1056 = vxor.u32 %v875, 2147483648
    %v1057 = vxor.u32 %v877, 2147483648
    %v1058 = vxor.u32 %v988, 2147483648
    %v1059 = vxor.u32 %v990, 2147483648
    %v1060 = vxor.u32 %v881, 2147483648
    %v1061 = vxor.u32 %v883, 2147483648
    %v1062 = vxor.u32 %v994, 2147483648
    %v1063 = vxor.u32 %v996, 2147483648
    %v1064 = vxor.u32 %v885, 2147483648
    %v1065 = vxor.u32 %v887, 2147483648
    %v1066 = vxor.u32 %v998, 2147483648
    %v1067 = vxor.u32 %v1000, 2147483648
    %v1068 = vxor.u32 %v891, 2147483648
    %v1069 = vxor.u32 %v893, 2147483648
    %v1070 = vxor.u32 %v1004, 2147483648
    %v1071 = vxor.u32 %v1006, 2147483648
    %v1072 = vxor.u32 %v895, 2147483648
    %v1073 = vxor.u32 %v897, 2147483648
    %v1074 = vxor.u32 %v1008, 2147483648
    %v1075 = vxor.u32 %v1010, 2147483648
    %v1076 = vmul.f32 %v1012, 1.442695
    %v1077 = vpow.pop %v1076
    %v1078 = vmul.f32 %v1013, 1.442695
    %v1079 = vpow.pop %v1078
    %v1080 = vmul.f32 %v1014, 1.442695
    %v1081 = vpow.pop %v1080
    %v1082 = vmul.f32 %v1015, 1.442695
    %v1083 = vpow.pop %v1082
    %v1084 = vmul.f32 %v1016, 1.442695
    %v1085 = vpow.pop %v1084
    %v1086 = vmul.f32 %v1017, 1.442695
    %v1087 = vpow.pop %v1086
    %v1088 = vmul.f32 %v1018, 1.442695
    %v1089 = vpow.pop %v1088
    %v1090 = vmul.f32 %v1019, 1.442695
    %v1091 = vpow.pop %v1090
    %v1092 = vmul.f32 %v1020, 1.442695
    %v1093 = vpow.pop %v1092
    %v1094 = vmul.f32 %v1021, 1.442695
    %v1095 = vpow.pop %v1094
    %v1096 = vmul.f32 %v1022, 1.442695
    %v1097 = vpow.pop %v1096
    %v1098 = vmul.f32 %v1023, 1.442695
    %v1099 = vpow.pop %v1098
    %v1100 = vmul.f32 %v1024, 1.442695
    %v1101 = vpow.pop %v1100
    %v1102 = vmul.f32 %v1025, 1.442695
    %v1103 = vpow.pop %v1102
    %v1104 = vmul.f32 %v1026, 1.442695
    %v1105 = vpow.pop %v1104
    %v1106 = vmul.f32 %v1027, 1.442695
    %v1107 = vpow.pop %v1106
    %v1108 = vmul.f32 %v1028, 1.442695
    %v1109 = vpow.pop %v1108
    %v1110 = vmul.f32 %v1029, 1.442695
    %v1111 = vpow.pop %v1110
    %v1112 = vmul.f32 %v1030, 1.442695
    %v1113 = vpow.pop %v1112
    %v1114 = vmul.f32 %v1031, 1.442695
    %v1115 = vpow.pop %v1114
    %v1116 = vmul.f32 %v1032, 1.442695
    %v1117 = vpow.pop %v1116
    %v1118 = vmul.f32 %v1033, 1.442695
    %v1119 = vpow.pop %v1118
    %v1120 = vmul.f32 %v1034, 1.442695
    %v1121 = vpow.pop %v1120
    %v1122 = vmul.f32 %v1035, 1.442695
    %v1123 = vpow.pop %v1122
    %v1124 = vmul.f32 %v1036, 1.442695
    %v1125 = vpow.pop %v1124
    %v1126 = vmul.f32 %v1037, 1.442695
    %v1127 = vpow.pop %v1126
    %v1128 = vmul.f32 %v1038, 1.442695
    %v1129 = vpow.pop %v1128
    %v1130 = vmul.f32 %v1039, 1.442695
    %v1131 = vpow.pop %v1130
    %v1132 = vmul.f32 %v1040, 1.442695
    %v1133 = vpow.pop %v1132
    %v1134 = vmul.f32 %v1041, 1.442695
    %v1135 = vpow.pop %v1134
    %v1136 = vmul.f32 %v1042, 1.442695
    %v1137 = vpow.pop %v1136
    %v1138 = vmul.f32 %v1043, 1.442695
    %v1139 = vpow.pop %v1138
    %v1140 = vmul.f32 %v1044, 1.442695
    %v1141 = vpow.pop %v1140
    %v1142 = vmul.f32 %v1045, 1.442695
    %v1143 = vpow.pop %v1142
    %v1144 = vmul.f32 %v1046, 1.442695
    %v1145 = vpow.pop %v1144
    %v1146 = vmul.f32 %v1047, 1.442695
    %v1147 = vpow.pop %v1146
    %v1148 = vmul.f32 %v1048, 1.442695
    %v1149 = vpow.pop %v1148
    %v1150 = vmul.f32 %v1049, 1.442695
    %v1151 = vpow.pop %v1150
    %v1152 = vmul.f32 %v1050, 1.442695
    %v1153 = vpow.pop %v1152
    %v1154 = vmul.f32 %v1051, 1.442695
    %v1155 = vpow.pop %v1154
    %v1156 = vmul.f32 %v1052, 1.442695
    %v1157 = vpow.pop %v1156
    %v1158 = vmul.f32 %v1053, 1.442695
    %v1159 = vpow.pop %v1158
    %v1160 = vmul.f32 %v1054, 1.442695
    %v1161 = vpow.pop %v1160
    %v1162 = vmul.f32 %v1055, 1.442695
    %v1163 = vpow.pop %v1162
    %v1164 = vmul.f32 %v1056, 1.442695
    %v1165 = vpow.pop %v1164
    %v1166 = vmul.f32 %v1057, 1.442695
    %v1167 = vpow.pop %v1166
    %v1168 = vmul.f32 %v1058, 1.442695
    %v1169 = vpow.pop %v1168
    %v1170 = vmul.f32 %v1059, 1.442695
    %v1171 = vpow.pop %v1170
    %v1172 = vmul.f32 %v1060, 1.442695
    %v1173 = vpow.pop %v1172
    %v1174 = vmul.f32 %v1061, 1.442695
    %v1175 = vpow.pop %v1174
    %v1176 = vmul.f32 %v1062, 1.442695
    %v1177 = vpow.pop %v1176
    %v1178 = vmul.f32 %v1063, 1.442695
    %v1179 = vpow.pop %v1178
    %v1180 = vmul.f32 %v1064, 1.442695
    %v1181 = vpow.pop %v1180
    %v1182 = vmul.f32 %v1065, 1.442695
    %v1183 = vpow.pop %v1182
    %v1184 = vmul.f32 %v1066, 1.442695
    %v1185 = vpow.pop %v1184
    %v1186 = vmul.f32 %v1067, 1.442695
    %v1187 = vpow.pop %v1186
    %v1188 = vmul.f32 %v1068, 1.442695
    %v1189 = vpow.pop %v1188
    %v1190 = vmul.f32 %v1069, 1.442695
    %v1191 = vpow.pop %v1190
    %v1192 = vmul.f32 %v1070, 1.442695
    %v1193 = vpow.pop %v1192
    %v1194 = vmul.f32 %v1071, 1.442695
    %v1195 = vpow.pop %v1194
    %v1196 = vmul.f32 %v1072, 1.442695
    %v1197 = vpow.pop %v1196
    %v1198 = vmul.f32 %v1073, 1.442695
    %v1199 = vpow.pop %v1198
    %v1200 = vmul.f32 %v1074, 1.442695
    %v1201 = vpow.pop %v1200
    %v1202 = vmul.f32 %v1075, 1.442695
    %v1203 = vpow.pop %v1202
    %v1204 = vadd.f32 %v1077, 1.0
    %v1205 = vadd.f32 %v1079, 1.0
    %v1206 = vadd.f32 %v1081, 1.0
    %v1207 = vadd.f32 %v1083, 1.0
    %v1208 = vadd.f32 %v1085, 1.0
    %v1209 = vadd.f32 %v1087, 1.0
    %v1210 = vadd.f32 %v1089, 1.0
    %v1211 = vadd.f32 %v1091, 1.0
    %v1212 = vadd.f32 %v1093, 1.0
    %v1213 = vadd.f32 %v1095, 1.0
    %v1214 = vadd.f32 %v1097, 1.0
    %v1215 = vadd.f32 %v1099, 1.0
    %v1216 = vadd.f32 %v1101, 1.0
    %v1217 = vadd.f32 %v1103, 1.0
    %v1218 = vadd.f32 %v1105, 1.0
    %v1219 = vadd.f32 %v1107, 1.0
    %v1220 = vadd.f32 %v1109, 1.0
    %v1221 = vadd.f32 %v1111, 1.0
    %v1222 = vadd.f32 %v1113, 1.0
    %v1223 = vadd.f32 %v1115, 1.0
    %v1224 = vadd.f32 %v1117, 1.0
    %v1225 = vadd.f32 %v1119, 1.0
    %v1226 = vadd.f32 %v1121, 1.0
    %v1227 = vadd.f32 %v1123, 1.0
    %v1228 = vadd.f32 %v1125, 1.0
    %v1229 = vadd.f32 %v1127, 1.0
    %v1230 = vadd.f32 %v1129, 1.0
    %v1231 = vadd.f32 %v1131, 1.0
    %v1232 = vadd.f32 %v1133, 1.0
    %v1233 = vadd.f32 %v1135, 1.0
    %v1234 = vadd.f32 %v1137, 1.0
    %v1235 = vadd.f32 %v1139, 1.0
    %v1236 = vadd.f32 %v1141, 1.0
    %v1237 = vadd.f32 %v1143, 1.0
    %v1238 = vadd.f32 %v1145, 1.0
    %v1239 = vadd.f32 %v1147, 1.0
    %v1240 = vadd.f32 %v1149, 1.0
    %v1241 = vadd.f32 %v1151, 1.0
    %v1242 = vadd.f32 %v1153, 1.0
    %v1243 = vadd.f32 %v1155, 1.0
    %v1244 = vadd.f32 %v1157, 1.0
    %v1245 = vadd.f32 %v1159, 1.0
    %v1246 = vadd.f32 %v1161, 1.0
    %v1247 = vadd.f32 %v1163, 1.0
    %v1248 = vadd.f32 %v1165, 1.0
    %v1249 = vadd.f32 %v1167, 1.0
    %v1250 = vadd.f32 %v1169, 1.0
    %v1251 = vadd.f32 %v1171, 1.0
    %v1252 = vadd.f32 %v1173, 1.0
    %v1253 = vadd.f32 %v1175, 1.0
    %v1254 = vadd.f32 %v1177, 1.0
    %v1255 = vadd.f32 %v1179, 1.0
    %v1256 = vadd.f32 %v1181, 1.0
    %v1257 = vadd.f32 %v1183, 1.0
    %v1258 = vadd.f32 %v1185, 1.0
    %v1259 = vadd.f32 %v1187, 1.0
    %v1260 = vadd.f32 %v1189, 1.0
    %v1261 = vadd.f32 %v1191, 1.0
    %v1262 = vadd.f32 %v1193, 1.0
    %v1263 = vadd.f32 %v1195, 1.0
    %v1264 = vadd.f32 %v1197, 1.0
    %v1265 = vadd.f32 %v1199, 1.0
    %v1266 = vadd.f32 %v1201, 1.0
    %v1267 = vadd.f32 %v1203, 1.0
    %v1268 = vrcp.pop %v1204
    %v1269 = vmul.f32 1.0, %v1268
    %v1270 = vrcp.pop %v1205
    %v1271 = vmul.f32 1.0, %v1270
    %v1272 = vrcp.pop %v1206
    %v1273 = vmul.f32 1.0, %v1272
    %v1274 = vrcp.pop %v1207
    %v1275 = vmul.f32 1.0, %v1274
    %v1276 = vrcp.pop %v1208
    %v1277 = vmul.f32 1.0, %v1276
    %v1278 = vrcp.pop %v1209
    %v1279 = vmul.f32 1.0, %v1278
    %v1280 = vrcp.pop %v1210
    %v1281 = vmul.f32 1.0, %v1280
    %v1282 = vrcp.pop %v1211
    %v1283 = vmul.f32 1.0, %v1282
    %v1284 = vrcp.pop %v1212
    %v1285 = vmul.f32 1.0, %v1284
    %v1286 = vrcp.pop %v1213
    %v1287 = vmul.f32 1.0, %v1286
    %v1288 = vrcp.pop %v1214
    %v1289 = vmul.f32 1.0, %v1288
    %v1290 = vrcp.pop %v1215
    %v1291 = vmul.f32 1.0, %v1290
    %v1292 = vrcp.pop %v1216
    %v1293 = vmul.f32 1.0, %v1292
    %v1294 = vrcp.pop %v1217
    %v1295 = vmul.f32 1.0, %v1294
    %v1296 = vrcp.pop %v1218
    %v1297 = vmul.f32 1.0, %v1296
    %v1298 = vrcp.pop %v1219
    %v1299 = vmul.f32 1.0, %v1298
    %v1300 = vrcp.pop %v1220
    %v1301 = vmul.f32 1.0, %v1300
    %v1302 = vrcp.pop %v1221
    %v1303 = vmul.f32 1.0, %v1302
    %v1304 = vrcp.pop %v1222
    %v1305 = vmul.f32 1.0, %v1304
    %v1306 = vrcp.pop %v1223
    %v1307 = vmul.f32 1.0, %v1306
    %v1308 = vrcp.pop %v1224
    %v1309 = vmul.f32 1.0, %v1308
    %v1310 = vrcp.pop %v1225
    %v1311 = vmul.f32 1.0, %v1310
    %v1312 = vrcp.pop %v1226
    %v1313 = vmul.f32 1.0, %v1312
    %v1314 = vrcp.pop %v1227
    %v1315 = vmul.f32 1.0, %v1314
    %v1316 = vrcp.pop %v1228
    %v1317 = vmul.f32 1.0, %v1316
    %v1318 = vrcp.pop %v1229
    %v1319 = vmul.f32 1.0, %v1318
    %v1320 = vrcp.pop %v1230
    %v1321 = vmul.f32 1.0, %v1320
    %v1322 = vrcp.pop %v1231
    %v1323 = vmul.f32 1.0, %v1322
    %v1324 = vrcp.pop %v1232
    %v1325 = vmul.f32 1.0, %v1324
    %v1326 = vrcp.pop %v1233
    %v1327 = vmul.f32 1.0, %v1326
    %v1328 = vrcp.pop %v1234
    %v1329 = vmul.f32 1.0, %v1328
    %v1330 = vrcp.pop %v1235
    %v1331 = vmul.f32 1.0, %v1330
    %v1332 = vrcp.pop %v1236
    %v1333 = vmul.f32 1.0, %v1332
    %v1334 = vrcp.pop %v1237
    %v1335 = vmul.f32 1.0, %v1334
    %v1336 = vrcp.pop %v1238
    %v1337 = vmul.f32 1.0, %v1336
    %v1338 = vrcp.pop %v1239
    %v1339 = vmul.f32 1.0, %v1338
    %v1340 = vrcp.pop %v1240
    %v1341 = vmul.f32 1.0, %v1340
    %v1342 = vrcp.pop %v1241
    %v1343 = vmul.f32 1.0, %v1342
    %v1344 = vrcp.pop %v1242
    %v1345 = vmul.f32 1.0, %v1344
    %v1346 = vrcp.pop %v1243
    %v1347 = vmul.f32 1.0, %v1346
    %v1348 = vrcp.pop %v1244
    %v1349 = vmul.f32 1.0, %v1348
    %v1350 = vrcp.pop %v1245
    %v1351 = vmul.f32 1.0, %v1350
    %v1352 = vrcp.pop %v1246
    %v1353 = vmul.f32 1.0, %v1352
    %v1354 = vrcp.pop %v1247
    %v1355 = vmul.f32 1.0, %v1354
    %v1356 = vrcp.pop %v1248
    %v1357 = vmul.f32 1.0, %v1356
    %v1358 = vrcp.pop %v1249
    %v1359 = vmul.f32 1.0, %v1358
    %v1360 = vrcp.pop %v1250
    %v1361 = vmul.f32 1.0, %v1360
    %v1362 = vrcp.pop %v1251
    %v1363 = vmul.f32 1.0, %v1362
    %v1364 = vrcp.pop %v1252
    %v1365 = vmul.f32 1.0, %v1364
    %v1366 = vrcp.pop %v1253
    %v1367 = vmul.f32 1.0, %v1366
    %v1368 = vrcp.pop %v1254
    %v1369 = vmul.f32 1.0, %v1368
    %v1370 = vrcp.pop %v1255
    %v1371 = vmul.f32 1.0, %v1370
    %v1372 = vrcp.pop %v1256
    %v1373 = vmul.f32 1.0, %v1372
    %v1374 = vrcp.pop %v1257
    %v1375 = vmul.f32 1.0, %v1374
    %v1376 = vrcp.pop %v1258
    %v1377 = vmul.f32 1.0, %v1376
    %v1378 = vrcp.pop %v1259
    %v1379 = vmul.f32 1.0, %v1378
    %v1380 = vrcp.pop %v1260
    %v1381 = vmul.f32 1.0, %v1380
    %v1382 = vrcp.pop %v1261
    %v1383 = vmul.f32 1.0, %v1382
    %v1384 = vrcp.pop %v1262
    %v1385 = vmul.f32 1.0, %v1384
    %v1386 = vrcp.pop %v1263
    %v1387 = vmul.f32 1.0, %v1386
    %v1388 = vrcp.pop %v1264
    %v1389 = vmul.f32 1.0, %v1388
    %v1390 = vrcp.pop %v1265
    %v1391 = vmul.f32 1.0, %v1390
    %v1392 = vrcp.pop %v1266
    %v1393 = vmul.f32 1.0, %v1392
    %v1394 = vrcp.pop %v1267
    %v1395 = vmul.f32 1.0, %v1394
    %v1396 = vmul.f32 %v821, %v1269
    %v1397 = vmul.f32 %v823, %v1271
    %v1398 = vmul.f32 %v934, %v1273
    %v1399 = vmul.f32 %v936, %v1275
    %v1400 = vmul.f32 %v825, %v1277
    %v1401 = vmul.f32 %v827, %v1279
    %v1402 = vmul.f32 %v938, %v1281
    %v1403 = vmul.f32 %v940, %v1283
    %v1404 = vmul.f32 %v831, %v1285
    %v1405 = vmul.f32 %v833, %v1287
    %v1406 = vmul.f32 %v944, %v1289
    %v1407 = vmul.f32 %v946, %v1291
    %v1408 = vmul.f32 %v835, %v1293
    %v1409 = vmul.f32 %v837, %v1295
    %v1410 = vmul.f32 %v948, %v1297
    %v1411 = vmul.f32 %v950, %v1299
    %v1412 = vmul.f32 %v841, %v1301
    %v1413 = vmul.f32 %v843, %v1303
    %v1414 = vmul.f32 %v954, %v1305
    %v1415 = vmul.f32 %v956, %v1307
    %v1416 = vmul.f32 %v845, %v1309
    %v1417 = vmul.f32 %v847, %v1311
    %v1418 = vmul.f32 %v958, %v1313
    %v1419 = vmul.f32 %v960, %v1315
    %v1420 = vmul.f32 %v851, %v1317
    %v1421 = vmul.f32 %v853, %v1319
    %v1422 = vmul.f32 %v964, %v1321
    %v1423 = vmul.f32 %v966, %v1323
    %v1424 = vmul.f32 %v855, %v1325
    %v1425 = vmul.f32 %v857, %v1327
    %v1426 = vmul.f32 %v968, %v1329
    %v1427 = vmul.f32 %v970, %v1331
    %v1428 = vmul.f32 %v861, %v1333
    %v1429 = vmul.f32 %v863, %v1335
    %v1430 = vmul.f32 %v974, %v1337
    %v1431 = vmul.f32 %v976, %v1339
    %v1432 = vmul.f32 %v865, %v1341
    %v1433 = vmul.f32 %v867, %v1343
    %v1434 = vmul.f32 %v978, %v1345
    %v1435 = vmul.f32 %v980, %v1347
    %v1436 = vmul.f32 %v871, %v1349
    %v1437 = vmul.f32 %v873, %v1351
    %v1438 = vmul.f32 %v984, %v1353
    %v1439 = vmul.f32 %v986, %v1355
    %v1440 = vmul.f32 %v875, %v1357
    %v1441 = vmul.f32 %v877, %v1359
    %v1442 = vmul.f32 %v988, %v1361
    %v1443 = vmul.f32 %v990, %v1363
    %v1444 = vmul.f32 %v881, %v1365
    %v1445 = vmul.f32 %v883, %v1367
    %v1446 = vmul.f32 %v994, %v1369
    %v1447 = vmul.f32 %v996, %v1371
    %v1448 = vmul.f32 %v885, %v1373
    %v1449 = vmul.f32 %v887, %v1375
    %v1450 = vmul.f32 %v998, %v1377
    %v1451 = vmul.f32 %v1000, %v1379
    %v1452 = vmul.f32 %v891, %v1381
    %v1453 = vmul.f32 %v893, %v1383
    %v1454 = vmul.f32 %v1004, %v1385
    %v1455 = vmul.f32 %v1006, %v1387
    %v1456 = vmul.f32 %v895, %v1389
    %v1457 = vmul.f32 %v897, %v1391
    %v1458 = vmul.f32 %v1008, %v1393
    %v1459 = vmul.f32 %v1010, %v1395
    %v1460 = vmul.f32 %v381, %v1396
    %v1461 = vmul.f32 %v383, %v1397
    %v1462 = vmul.f32 %v494, %v1398
    %v1463 = vmul.f32 %v496, %v1399
    %v1464 = vmul.f32 %v385, %v1400
    %v1465 = vmul.f32 %v387, %v1401
    %v1466 = vmul.f32 %v498, %v1402
    %v1467 = vmul.f32 %v500, %v1403
    %v1468 = vmul.f32 %v391, %v1404
    %v1469 = vmul.f32 %v393, %v1405
    %v1470 = vmul.f32 %v504, %v1406
    %v1471 = vmul.f32 %v506, %v1407
    %v1472 = vmul.f32 %v395, %v1408
    %v1473 = vmul.f32 %v397, %v1409
    %v1474 = vmul.f32 %v508, %v1410
    %v1475 = vmul.f32 %v510, %v1411
    %v1476 = vmul.f32 %v401, %v1412
    %v1477 = vmul.f32 %v403, %v1413
    %v1478 = vmul.f32 %v514, %v1414
    %v1479 = vmul.f32 %v516, %v1415
    %v1480 = vmul.f32 %v405, %v1416
    %v1481 = vmul.f32 %v407, %v1417
    %v1482 = vmul.f32 %v518, %v1418
    %v1483 = vmul.f32 %v520, %v1419
    %v1484 = vmul.f32 %v411, %v1420
    %v1485 = vmul.f32 %v413, %v1421
    %v1486 = vmul.f32 %v524, %v1422
    %v1487 = vmul.f32 %v526, %v1423
    %v1488 = vmul.f32 %v415, %v1424
    %v1489 = vmul.f32 %v417, %v1425
    %v1490 = vmul.f32 %v528, %v1426
    %v1491 = vmul.f32 %v530, %v1427
    %v1492 = vmul.f32 %v421, %v1428
    %v1493 = vmul.f32 %v423, %v1429
    %v1494 = vmul.f32 %v534, %v1430
    %v1495 = vmul.f32 %v536, %v1431
    %v1496 = vmul.f32 %v425, %v1432
    %v1497 = vmul.f32 %v427, %v1433
    %v1498 = vmul.f32 %v538, %v1434
    %v1499 = vmul.f32 %v540, %v1435
    %v1500 = vmul.f32 %v431, %v1436
    %v1501 = vmul.f32 %v433, %v1437
    %v1502 = vmul.f32 %v544, %v1438
    %v1503 = vmul.f32 %v546, %v1439
    %v1504 = vmul.f32 %v435, %v1440
    %v1505 = vmul.f32 %v437, %v1441
    %v1506 = vmul.f32 %v548, %v1442
    %v1507 = vmul.f32 %v550, %v1443
    %v1508 = vmul.f32 %v441, %v1444
    %v1509 = vmul.f32 %v443, %v1445
    %v1510 = vmul.f32 %v554, %v1446
    %v1511 = vmul.f32 %v556, %v1447
    %v1512 = vmul.f32 %v445, %v1448
    %v1513 = vmul.f32 %v447, %v1449
    %v1514 = vmul.f32 %v558, %v1450
    %v1515 = vmul.f32 %v560, %v1451
    %v1516 = vmul.f32 %v451, %v1452
    %v1517 = vmul.f32 %v453, %v1453
    %v1518 = vmul.f32 %v564, %v1454
    %v1519 = vmul.f32 %v566, %v1455
    %v1520 = vmul.f32 %v455, %v1456
    %v1521 = vmul.f32 %v457, %v1457
    %v1522 = vmul.f32 %v568, %v1458
    %v1523 = vmul.f32 %v570, %v1459
    %v1524 = vpack.c.bf16 %v1464, %v1460
    %v1525 = vpack.c.bf16 %v1465, %v1461
    %v1526 = vpack.c.bf16 %v1466, %v1462
    %v1527 = vpack.c.bf16 %v1467, %v1463
    %v1528 = vpack.c.bf16 %v1472, %v1468
    %v1529 = vpack.c.bf16 %v1473, %v1469
    %v1530 = vpack.c.bf16 %v1474, %v1470
    %v1531 = vpack.c.bf16 %v1475, %v1471
    %v1532 = vpack.c.bf16 %v1480, %v1476
    %v1533 = vpack.c.bf16 %v1481, %v1477
    %v1534 = vpack.c.bf16 %v1482, %v1478
    %v1535 = vpack.c.bf16 %v1483, %v1479
    %v1536 = vpack.c.bf16 %v1488, %v1484
    %v1537 = vpack.c.bf16 %v1489, %v1485
    %v1538 = vpack.c.bf16 %v1490, %v1486
    %v1539 = vpack.c.bf16 %v1491, %v1487
    %v1540 = vpack.c.bf16 %v1496, %v1492
    %v1541 = vpack.c.bf16 %v1497, %v1493
    %v1542 = vpack.c.bf16 %v1498, %v1494
    %v1543 = vpack.c.bf16 %v1499, %v1495
    %v1544 = vpack.c.bf16 %v1504, %v1500
    %v1545 = vpack.c.bf16 %v1505, %v1501
    %v1546 = vpack.c.bf16 %v1506, %v1502
    %v1547 = vpack.c.bf16 %v1507, %v1503
    %v1548 = vpack.c.bf16 %v1512, %v1508
    %v1549 = vpack.c.bf16 %v1513, %v1509
    %v1550 = vpack.c.bf16 %v1514, %v1510
    %v1551 = vpack.c.bf16 %v1515, %v1511
    %v1552 = vpack.c.bf16 %v1520, %v1516
    %v1553 = vpack.c.bf16 %v1521, %v1517
    %v1554 = vpack.c.bf16 %v1522, %v1518
    %v1555 = vpack.c.bf16 %v1523, %v1519
    %v1556 = vld [vmem:[#allocation7] sm:$0xf]
    %v1557 = vld [vmem:[#allocation7 + $0x4] sm:$0xf]
    %v1558 = vld [vmem:[#allocation7 + $0x8] sm:$0xf]
    %v1559 = vld [vmem:[#allocation7 + $0xc] sm:$0xf]
    %v1560 = vld [vmem:[#allocation7 + $0x10] sm:$0xf]
    %v1561 = vld [vmem:[#allocation7 + $0x14] sm:$0xf]
    %v1562 = vld [vmem:[#allocation7 + $0x18] sm:$0xf]
    %v1563 = vld [vmem:[#allocation7 + $0x1c] sm:$0xf]
    %v1564 = vld [vmem:[#allocation7 + $0x20] sm:$0xf]
    %v1565 = vld [vmem:[#allocation7 + $0x24] sm:$0xf]
    %v1566 = vld [vmem:[#allocation7 + $0x28] sm:$0xf]
    %v1567 = vld [vmem:[#allocation7 + $0x2c] sm:$0xf]
    %v1568 = vld [vmem:[#allocation7 + $0x30] sm:$0xf]
    %v1569 = vld [vmem:[#allocation7 + $0x34] sm:$0xf]
    %v1570 = vld [vmem:[#allocation7 + $0x38] sm:$0xf]
    %v1571 = vld [vmem:[#allocation7 + $0x3c] sm:$0xf]
    %v1572 = vld [vmem:[#allocation7 + $0x40] sm:$0xf]
    %v1573 = vld [vmem:[#allocation7 + $0x44] sm:$0xf]
    %v1574 = vld [vmem:[#allocation7 + $0x48] sm:$0xf]
    %v1575 = vld [vmem:[#allocation7 + $0x4c] sm:$0xf]
    %v1576 = vld [vmem:[#allocation7 + $0x50] sm:$0xf]
    %v1577 = vld [vmem:[#allocation7 + $0x54] sm:$0xf]
    %v1578 = vld [vmem:[#allocation7 + $0x58] sm:$0xf]
    %v1579 = vld [vmem:[#allocation7 + $0x5c] sm:$0xf]
    %v1580 = vld [vmem:[#allocation7 + $0x60] sm:$0xf]
    %v1581 = vld [vmem:[#allocation7 + $0x64] sm:$0xf]
    %v1582 = vld [vmem:[#allocation7 + $0x68] sm:$0xf]
    %v1583 = vld [vmem:[#allocation7 + $0x6c] sm:$0xf]
    %v1584 = vld [vmem:[#allocation7 + $0x70] sm:$0xf]
    %v1585 = vld [vmem:[#allocation7 + $0x74] sm:$0xf]
    %v1586 = vld [vmem:[#allocation7 + $0x78] sm:$0xf]
    %v1587 = vld [vmem:[#allocation7 + $0x7c] sm:$0xf]
    %v1588 = vld [vmem:[#allocation7 + $0x80] sm:$0xf]
    %v1589 = vld [vmem:[#allocation7 + $0x84] sm:$0xf]
    %v1590 = vld [vmem:[#allocation7 + $0x88] sm:$0xf]
    %v1591 = vld [vmem:[#allocation7 + $0x8c] sm:$0xf]
    %v1592 = vld [vmem:[#allocation7 + $0x90] sm:$0xf]
    %v1593 = vld [vmem:[#allocation7 + $0x94] sm:$0xf]
    %v1594 = vld [vmem:[#allocation7 + $0x98] sm:$0xf]
    %v1595 = vld [vmem:[#allocation7 + $0x9c] sm:$0xf]
    %v1596 = vld [vmem:[#allocation7 + $0xa0] sm:$0xf]
    %v1597 = vld [vmem:[#allocation7 + $0xa4] sm:$0xf]
    %v1598 = vld [vmem:[#allocation7 + $0xa8] sm:$0xf]
    %v1599 = vld [vmem:[#allocation7 + $0xac] sm:$0xf]
    %v1600 = vld [vmem:[#allocation7 + $0xb0] sm:$0xf]
    %v1601 = vld [vmem:[#allocation7 + $0xb4] sm:$0xf]
    %v1602 = vld [vmem:[#allocation7 + $0xb8] sm:$0xf]
    %v1603 = vld [vmem:[#allocation7 + $0xbc] sm:$0xf]
    %v1604 = vld [vmem:[#allocation7 + $0xc0] sm:$0xf]
    %v1605 = vld [vmem:[#allocation7 + $0xc4] sm:$0xf]
    %v1606 = vld [vmem:[#allocation7 + $0xc8] sm:$0xf]
    %v1607 = vld [vmem:[#allocation7 + $0xcc] sm:$0xf]
    %v1608 = vld [vmem:[#allocation7 + $0xd0] sm:$0xf]
    %v1609 = vld [vmem:[#allocation7 + $0xd4] sm:$0xf]
    %v1610 = vld [vmem:[#allocation7 + $0xd8] sm:$0xf]
    %v1611 = vld [vmem:[#allocation7 + $0xdc] sm:$0xf]
    %v1612 = vld [vmem:[#allocation7 + $0xe0] sm:$0xf]
    %v1613 = vld [vmem:[#allocation7 + $0xe4] sm:$0xf]
    %v1614 = vld [vmem:[#allocation7 + $0xe8] sm:$0xf]
    %v1615 = vld [vmem:[#allocation7 + $0xec] sm:$0xf]
    %v1616 = vld [vmem:[#allocation7 + $0xf0] sm:$0xf]
    %v1617 = vld [vmem:[#allocation7 + $0xf4] sm:$0xf]
    %v1618 = vld [vmem:[#allocation7 + $0xf8] sm:$0xf]
    %v1619 = vld [vmem:[#allocation7 + $0xfc] sm:$0xf]
    %v1684 = vunpack.c.l.b16 %v1556
    %v1685 = vunpack.c.l.b16 %v1557
    %v1686 = vunpack.c.l.b16 %v1558
    %v1687 = vunpack.c.l.b16 %v1559
    %v1688 = vunpack.c.l.b16 %v1560
    %v1689 = vunpack.c.l.b16 %v1561
    %v1690 = vunpack.c.l.b16 %v1562
    %v1691 = vunpack.c.l.b16 %v1563
    %v1692 = vunpack.c.l.b16 %v1564
    %v1693 = vunpack.c.l.b16 %v1565
    %v1694 = vunpack.c.l.b16 %v1566
    %v1695 = vunpack.c.l.b16 %v1567
    %v1696 = vunpack.c.l.b16 %v1568
    %v1697 = vunpack.c.l.b16 %v1569
    %v1698 = vunpack.c.l.b16 %v1570
    %v1699 = vunpack.c.l.b16 %v1571
    %v1700 = vunpack.c.l.b16 %v1572
    %v1701 = vunpack.c.l.b16 %v1573
    %v1702 = vunpack.c.l.b16 %v1574
    %v1703 = vunpack.c.l.b16 %v1575
    %v1704 = vunpack.c.l.b16 %v1576
    %v1705 = vunpack.c.l.b16 %v1577
    %v1706 = vunpack.c.l.b16 %v1578
    %v1707 = vunpack.c.l.b16 %v1579
    %v1708 = vunpack.c.l.b16 %v1580
    %v1709 = vunpack.c.l.b16 %v1581
    %v1710 = vunpack.c.l.b16 %v1582
    %v1711 = vunpack.c.l.b16 %v1583
    %v1712 = vunpack.c.l.b16 %v1584
    %v1713 = vunpack.c.l.b16 %v1585
    %v1714 = vunpack.c.l.b16 %v1586
    %v1715 = vunpack.c.l.b16 %v1587
    %v1716 = vunpack.c.l.b16 %v1588
    %v1717 = vunpack.c.l.b16 %v1589
    %v1718 = vunpack.c.l.b16 %v1590
    %v1719 = vunpack.c.l.b16 %v1591
    %v1720 = vunpack.c.l.b16 %v1592
    %v1721 = vunpack.c.l.b16 %v1593
    %v1722 = vunpack.c.l.b16 %v1594
    %v1723 = vunpack.c.l.b16 %v1595
    %v1724 = vunpack.c.l.b16 %v1596
    %v1725 = vunpack.c.l.b16 %v1597
    %v1726 = vunpack.c.l.b16 %v1598
    %v1727 = vunpack.c.l.b16 %v1599
    %v1728 = vunpack.c.l.b16 %v1600
    %v1729 = vunpack.c.l.b16 %v1601
    %v1730 = vunpack.c.l.b16 %v1602
    %v1731 = vunpack.c.l.b16 %v1603
    %v1732 = vunpack.c.l.b16 %v1604
    %v1733 = vunpack.c.l.b16 %v1605
    %v1734 = vunpack.c.l.b16 %v1606
    %v1735 = vunpack.c.l.b16 %v1607
    %v1736 = vunpack.c.l.b16 %v1608
    %v1737 = vunpack.c.l.b16 %v1609
    %v1738 = vunpack.c.l.b16 %v1610
    %v1739 = vunpack.c.l.b16 %v1611
    %v1740 = vunpack.c.l.b16 %v1612
    %v1741 = vunpack.c.l.b16 %v1613
    %v1742 = vunpack.c.l.b16 %v1614
    %v1743 = vunpack.c.l.b16 %v1615
    %v1744 = vunpack.c.l.b16 %v1616
    %v1745 = vunpack.c.l.b16 %v1617
    %v1746 = vunpack.c.l.b16 %v1618
    %v1747 = vunpack.c.l.b16 %v1619
    %v1748 = vpack.c.b16 %v1685, %v1684
    %v1749 = vpack.c.b16 %v1687, %v1686
    %v1750 = vpack.c.b16 %v1689, %v1688
    %v1751 = vpack.c.b16 %v1691, %v1690
    %v1752 = vpack.c.b16 %v1693, %v1692
    %v1753 = vpack.c.b16 %v1695, %v1694
    %v1754 = vpack.c.b16 %v1697, %v1696
    %v1755 = vpack.c.b16 %v1699, %v1698
    %v1756 = vpack.c.b16 %v1701, %v1700
    %v1757 = vpack.c.b16 %v1703, %v1702
    %v1758 = vpack.c.b16 %v1705, %v1704
    %v1759 = vpack.c.b16 %v1707, %v1706
    %v1760 = vpack.c.b16 %v1709, %v1708
    %v1761 = vpack.c.b16 %v1711, %v1710
    %v1762 = vpack.c.b16 %v1713, %v1712
    %v1763 = vpack.c.b16 %v1715, %v1714
    %v1764 = vpack.c.b16 %v1717, %v1716
    %v1765 = vpack.c.b16 %v1719, %v1718
    %v1766 = vpack.c.b16 %v1721, %v1720
    %v1767 = vpack.c.b16 %v1723, %v1722
    %v1768 = vpack.c.b16 %v1725, %v1724
    %v1769 = vpack.c.b16 %v1727, %v1726
    %v1770 = vpack.c.b16 %v1729, %v1728
    %v1771 = vpack.c.b16 %v1731, %v1730
    %v1772 = vpack.c.b16 %v1733, %v1732
    %v1773 = vpack.c.b16 %v1735, %v1734
    %v1774 = vpack.c.b16 %v1737, %v1736
    %v1775 = vpack.c.b16 %v1739, %v1738
    %v1776 = vpack.c.b16 %v1741, %v1740
    %v1777 = vpack.c.b16 %v1743, %v1742
    %v1778 = vpack.c.b16 %v1745, %v1744
    %v1779 = vpack.c.b16 %v1747, %v1746
    %1812 = vmatprep.subr.bf16.mxu0 0
    %1813 = vmatpush1.bf16.msra.mxu0 %v1748
    %1814 = vmatprep.subr.bf16.mxu0 0
    %1815 = vmatpush1.bf16.msra.mxu0 %v1749
    %1816 = vmatprep.subr.bf16.mxu0 0
    %1817 = vmatpush1.bf16.msra.mxu0 %v1750
    %1818 = vmatprep.subr.bf16.mxu0 0
    %1819 = vmatpush1.bf16.msra.mxu0 %v1751
    %1820 = vmatprep.subr.bf16.mxu0 0
    %1821 = vmatpush1.bf16.msra.mxu0 %v1752
    %1822 = vmatprep.subr.bf16.mxu0 0
    %1823 = vmatpush1.bf16.msra.mxu0 %v1753
    %1824 = vmatprep.subr.bf16.mxu0 0
    %1825 = vmatpush1.bf16.msra.mxu0 %v1754
    %1826 = vmatprep.subr.bf16.mxu0 0
    %1827 = vmatpush1.bf16.msra.mxu0 %v1755
    %1828 = vmatprep.subr.bf16.mxu0 0
    %1829 = vmatpush1.bf16.msra.mxu0 %v1756
    %1830 = vmatprep.subr.bf16.mxu0 0
    %1831 = vmatpush1.bf16.msra.mxu0 %v1757
    %1832 = vmatprep.subr.bf16.mxu0 0
    %1833 = vmatpush1.bf16.msra.mxu0 %v1758
    %1834 = vmatprep.subr.bf16.mxu0 0
    %1835 = vmatpush1.bf16.msra.mxu0 %v1759
    %1836 = vmatprep.subr.bf16.mxu0 0
    %1837 = vmatpush1.bf16.msra.mxu0 %v1760
    %1838 = vmatprep.subr.bf16.mxu0 0
    %1839 = vmatpush1.bf16.msra.mxu0 %v1761
    %1840 = vmatprep.subr.bf16.mxu0 0
    %1841 = vmatpush1.bf16.msra.mxu0 %v1762
    %1842 = vmatprep.subr.bf16.mxu0 0
    %1843 = vmatpush1.bf16.msra.mxu0 %v1763
    %1844 = vmatprep.mubr.bf16.mxu0 %v1525
    %1845 = vmatmul.mubr.bf16.gmra.mrb[0].mxu0 %v1524
    %v1846 = vpop.f32.mrb[0].mxu0
    %v1847 = vadd.f32 0.0, %v1846
    %v1848 = vpop.f32.mrb[0].mxu0
    %v1849 = vpop.f32.mrb[0].mxu0
    %v1850 = vadd.f32 0.0, %v1849
    %v1851 = vpop.f32.mrb[0].mxu0
    %1852 = vmatprep.mubr.bf16.mxu0 %v1529
    %1853 = vmatmul.mubr.bf16.gmra.mrb[0].mxu0 %v1528
    %v1854 = vpop.f32.mrb[0].mxu0
    %v1855 = vadd.f32 0.0, %v1854
    %v1856 = vpop.f32.mrb[0].mxu0
    %v1857 = vpop.f32.mrb[0].mxu0
    %v1858 = vadd.f32 0.0, %v1857
    %v1859 = vpop.f32.mrb[0].mxu0
    %1860 = vmatprep.mubr.bf16.mxu0 %v1533
    %1861 = vmatmul.mubr.bf16.gmra.mrb[0].mxu0 %v1532
    %v1862 = vpop.f32.mrb[0].mxu0
    %v1863 = vadd.f32 0.0, %v1862
    %v1864 = vpop.f32.mrb[0].mxu0
    %v1865 = vpop.f32.mrb[0].mxu0
    %v1866 = vadd.f32 0.0, %v1865
    %v1867 = vpop.f32.mrb[0].mxu0
    %1868 = vmatprep.mubr.bf16.mxu0 %v1537
    %1869 = vmatmul.mubr.bf16.gmra.mrb[0].mxu0 %v1536
    %v1870 = vpop.f32.mrb[0].mxu0
    %v1871 = vadd.f32 0.0, %v1870
    %v1872 = vpop.f32.mrb[0].mxu0
    %v1873 = vpop.f32.mrb[0].mxu0
    %v1874 = vadd.f32 0.0, %v1873
    %v1875 = vpop.f32.mrb[0].mxu0
    %1876 = vmatprep.mubr.bf16.mxu0 %v1541
    %1877 = vmatmul.mubr.bf16.gmra.mrb[0].mxu0 %v1540
    %v1878 = vpop.f32.mrb[0].mxu0
    %v1879 = vadd.f32 0.0, %v1878
    %v1880 = vpop.f32.mrb[0].mxu0
    %v1881 = vpop.f32.mrb[0].mxu0
    %v1882 = vadd.f32 0.0, %v1881
    %v1883 = vpop.f32.mrb[0].mxu0
    %1884 = vmatprep.mubr.bf16.mxu0 %v1545
    %1885 = vmatmul.mubr.bf16.gmra.mrb[0].mxu0 %v1544
    %v1886 = vpop.f32.mrb[0].mxu0
    %v1887 = vadd.f32 0.0, %v1886
    %v1888 = vpop.f32.mrb[0].mxu0
    %v1889 = vpop.f32.mrb[0].mxu0
    %v1890 = vadd.f32 0.0, %v1889
    %v1891 = vpop.f32.mrb[0].mxu0
    %1892 = vmatprep.mubr.bf16.mxu0 %v1549
    %1893 = vmatmul.mubr.bf16.gmra.mrb[0].mxu0 %v1548
    %v1894 = vpop.f32.mrb[0].mxu0
    %v1895 = vadd.f32 0.0, %v1894
    %v1896 = vpop.f32.mrb[0].mxu0
    %v1897 = vpop.f32.mrb[0].mxu0
    %v1898 = vadd.f32 0.0, %v1897
    %v1899 = vpop.f32.mrb[0].mxu0
    %1900 = vmatprep.mubr.bf16.mxu0 %v1553
    %1901 = vmatmul.mubr.bf16.gmra.mrb[0].mxu0 %v1552
    %v1902 = vpop.f32.mrb[0].mxu0
    %v1903 = vadd.f32 0.0, %v1902
    %v1904 = vpop.f32.mrb[0].mxu0
    %v1905 = vpop.f32.mrb[0].mxu0
    %v1906 = vadd.f32 0.0, %v1905
    %v1907 = vpop.f32.mrb[0].mxu0
    %1908 = vdwg.mxu0
    %1909 = vmatprep.subr.bf16.mxu0 0
    %1910 = vmatpush1.bf16.msra.mxu0 %v1764
    %1911 = vmatprep.subr.bf16.mxu0 0
    %1912 = vmatpush1.bf16.msra.mxu0 %v1765
    %1913 = vmatprep.subr.bf16.mxu0 0
    %1914 = vmatpush1.bf16.msra.mxu0 %v1766
    %1915 = vmatprep.subr.bf16.mxu0 0
    %1916 = vmatpush1.bf16.msra.mxu0 %v1767
    %1917 = vmatprep.subr.bf16.mxu0 0
    %1918 = vmatpush1.bf16.msra.mxu0 %v1768
    %1919 = vmatprep.subr.bf16.mxu0 0
    %1920 = vmatpush1.bf16.msra.mxu0 %v1769
    %1921 = vmatprep.subr.bf16.mxu0 0
    %1922 = vmatpush1.bf16.msra.mxu0 %v1770
    %1923 = vmatprep.subr.bf16.mxu0 0
    %1924 = vmatpush1.bf16.msra.mxu0 %v1771
    %1925 = vmatprep.subr.bf16.mxu0 0
    %1926 = vmatpush1.bf16.msra.mxu0 %v1772
    %1927 = vmatprep.subr.bf16.mxu0 0
    %1928 = vmatpush1.bf16.msra.mxu0 %v1773
    %1929 = vmatprep.subr.bf16.mxu0 0
    %1930 = vmatpush1.bf16.msra.mxu0 %v1774
    %1931 = vmatprep.subr.bf16.mxu0 0
    %1932 = vmatpush1.bf16.msra.mxu0 %v1775
    %1933 = vmatprep.subr.bf16.mxu0 0
    %1934 = vmatpush1.bf16.msra.mxu0 %v1776
    %1935 = vmatprep.subr.bf16.mxu0 0
    %1936 = vmatpush1.bf16.msra.mxu0 %v1777
    %1937 = vmatprep.subr.bf16.mxu0 0
    %1938 = vmatpush1.bf16.msra.mxu0 %v1778
    %1939 = vmatprep.subr.bf16.mxu0 0
    %1940 = vmatpush1.bf16.msra.mxu0 %v1779
    %1941 = vmatprep.mubr.bf16.mxu0 %v1527
    %1942 = vmatmul.mubr.bf16.gmra.mrb[0].mxu0 %v1526
    %v1943 = vpop.f32.mrb[0].mxu0
    %v1944 = vadd.f32 %v1847, %v1943
    %v1945 = vpop.f32.mrb[0].mxu0
    %v1946 = vpop.f32.mrb[0].mxu0
    %v1947 = vadd.f32 %v1850, %v1946
    %v1948 = vpop.f32.mrb[0].mxu0
    %1949 = vmatprep.mubr.bf16.mxu0 %v1531
    %1950 = vmatmul.mubr.bf16.gmra.mrb[0].mxu0 %v1530
    %v1951 = vpop.f32.mrb[0].mxu0
    %v1952 = vadd.f32 %v1855, %v1951
    %v1953 = vpop.f32.mrb[0].mxu0
    %v1954 = vpop.f32.mrb[0].mxu0
    %v1955 = vadd.f32 %v1858, %v1954
    %v1956 = vpop.f32.mrb[0].mxu0
    %1957 = vmatprep.mubr.bf16.mxu0 %v1535
    %1958 = vmatmul.mubr.bf16.gmra.mrb[0].mxu0 %v1534
    %v1959 = vpop.f32.mrb[0].mxu0
    %v1960 = vadd.f32 %v1863, %v1959
    %v1961 = vpop.f32.mrb[0].mxu0
    %v1962 = vpop.f32.mrb[0].mxu0
    %v1963 = vadd.f32 %v1866, %v1962
    %v1964 = vpop.f32.mrb[0].mxu0
    %1965 = vmatprep.mubr.bf16.mxu0 %v1539
    %1966 = vmatmul.mubr.bf16.gmra.mrb[0].mxu0 %v1538
    %v1967 = vpop.f32.mrb[0].mxu0
    %v1968 = vadd.f32 %v1871, %v1967
    %v1969 = vpop.f32.mrb[0].mxu0
    %v1970 = vpop.f32.mrb[0].mxu0
    %v1971 = vadd.f32 %v1874, %v1970
    %v1972 = vpop.f32.mrb[0].mxu0
    %1973 = vmatprep.mubr.bf16.mxu0 %v1543
    %1974 = vmatmul.mubr.bf16.gmra.mrb[0].mxu0 %v1542
    %v1975 = vpop.f32.mrb[0].mxu0
    %v1976 = vadd.f32 %v1879, %v1975
    %v1977 = vpop.f32.mrb[0].mxu0
    %v1978 = vpop.f32.mrb[0].mxu0
    %v1979 = vadd.f32 %v1882, %v1978
    %v1980 = vpop.f32.mrb[0].mxu0
    %1981 = vmatprep.mubr.bf16.mxu0 %v1547
    %1982 = vmatmul.mubr.bf16.gmra.mrb[0].mxu0 %v1546
    %v1983 = vpop.f32.mrb[0].mxu0
    %v1984 = vadd.f32 %v1887, %v1983
    %v1985 = vpop.f32.mrb[0].mxu0
    %v1986 = vpop.f32.mrb[0].mxu0
    %v1987 = vadd.f32 %v1890, %v1986
    %v1988 = vpop.f32.mrb[0].mxu0
    %1989 = vmatprep.mubr.bf16.mxu0 %v1551
    %1990 = vmatmul.mubr.bf16.gmra.mrb[0].mxu0 %v1550
    %v1991 = vpop.f32.mrb[0].mxu0
    %v1992 = vadd.f32 %v1895, %v1991
    %v1993 = vpop.f32.mrb[0].mxu0
    %v1994 = vpop.f32.mrb[0].mxu0
    %v1995 = vadd.f32 %v1898, %v1994
    %v1996 = vpop.f32.mrb[0].mxu0
    %1997 = vmatprep.mubr.bf16.mxu0 %v1555
    %1998 = vmatmul.mubr.bf16.gmra.mrb[0].mxu0 %v1554
    %v1999 = vpop.f32.mrb[0].mxu0
    %v2000 = vadd.f32 %v1903, %v1999
    %v2001 = vpop.f32.mrb[0].mxu0
    %v2002 = vpop.f32.mrb[0].mxu0
    %v2003 = vadd.f32 %v1906, %v2002
    %v2004 = vpop.f32.mrb[0].mxu0
    %2005 = vdwg.mxu0
    %p2006 = scmp.eq.s32.totalorder 0, 0
    // Predicated region
    $region42: #{mlp_forward.1} parent=1 // pred_check
      %p2007 = pneg %p2006
    $region43: #{mlp_forward.1} parent=1 // pred_check_branch
      %2009 = sbr.rel (%p2007) target = $region45
    $region44: #{mlp_forward.1} parent=1 // pred_region
      %v2010 = vld [vmem:[%s6] sm:$0x1]
      %v2012 = vlaneseq
      %v2013 = vshrl.u32 %v2012, 7
      %v2014 = vsub.s32 0, %v2013
      %v2015 = vrot.slane %v2010, %v2014
      %v2017 = vadd.f32 %v1944, %v2015
      %v2018 = vadd.f32 %v1947, %v2015
      %v2019 = vadd.f32 %v1952, %v2015
      %v2020 = vadd.f32 %v1955, %v2015
      %v2021 = vadd.f32 %v1960, %v2015
      %v2022 = vadd.f32 %v1963, %v2015
      %v2023 = vadd.f32 %v1968, %v2015
      %v2024 = vadd.f32 %v1971, %v2015
      %v2025 = vadd.f32 %v1976, %v2015
      %v2026 = vadd.f32 %v1979, %v2015
      %v2027 = vadd.f32 %v1984, %v2015
      %v2028 = vadd.f32 %v1987, %v2015
      %v2029 = vadd.f32 %v1992, %v2015
      %v2030 = vadd.f32 %v1995, %v2015
      %v2031 = vadd.f32 %v2000, %v2015
      %v2032 = vadd.f32 %v2003, %v2015
      %2033 = vst [vmem:[#allocation2] sm:$0xff] %v2017
      %2034 = vst [vmem:[#allocation2 + $0x8] sm:$0xff] %v2018
      %2035 = vst [vmem:[#allocation2 + $0x10] sm:$0xff] %v2019
      %2036 = vst [vmem:[#allocation2 + $0x18] sm:$0xff] %v2020
      %2037 = vst [vmem:[#allocation2 + $0x20] sm:$0xff] %v2021
      %2038 = vst [vmem:[#allocation2 + $0x28] sm:$0xff] %v2022
      %2039 = vst [vmem:[#allocation2 + $0x30] sm:$0xff] %v2023
      %2040 = vst [vmem:[#allocation2 + $0x38] sm:$0xff] %v2024
      %2041 = vst [vmem:[#allocation2 + $0x40] sm:$0xff] %v2025
      %2042 = vst [vmem:[#allocation2 + $0x48] sm:$0xff] %v2026
      %2043 = vst [vmem:[#allocation2 + $0x50] sm:$0xff] %v2027
      %2044 = vst [vmem:[#allocation2 + $0x58] sm:$0xff] %v2028
      %2045 = vst [vmem:[#allocation2 + $0x60] sm:$0xff] %v2029
      %2046 = vst [vmem:[#allocation2 + $0x68] sm:$0xff] %v2030
      %2047 = vst [vmem:[#allocation2 + $0x70] sm:$0xff] %v2031
      %2048 = vst [vmem:[#allocation2 + $0x78] sm:$0xff] %v2032
    $region45: #{mlp_forward.1} parent=1 // pred_fallthru
      _
    %p2049 = scmp.gt.s32.totalorder 0, 0
    // Predicated region
    $region46: #{mlp_forward.1} parent=1 // pred_check
      %p2050 = pneg %p2049
    $region47: #{mlp_forward.1} parent=1 // pred_check_branch
      %2052 = sbr.rel (%p2050) target = $region49
    $region48: #{mlp_forward.1} parent=1 // pred_region
      %v2053 = vld [vmem:[#allocation2] sm:$0xff]
      %v2054 = vld [vmem:[#allocation2 + $0x8] sm:$0xff]
      %v2055 = vld [vmem:[#allocation2 + $0x10] sm:$0xff]
      %v2056 = vld [vmem:[#allocation2 + $0x18] sm:$0xff]
      %v2057 = vld [vmem:[#allocation2 + $0x20] sm:$0xff]
      %v2058 = vld [vmem:[#allocation2 + $0x28] sm:$0xff]
      %v2059 = vld [vmem:[#allocation2 + $0x30] sm:$0xff]
      %v2060 = vld [vmem:[#allocation2 + $0x38] sm:$0xff]
      %v2061 = vld [vmem:[#allocation2 + $0x40] sm:$0xff]
      %v2062 = vld [vmem:[#allocation2 + $0x48] sm:$0xff]
      %v2063 = vld [vmem:[#allocation2 + $0x50] sm:$0xff]
      %v2064 = vld [vmem:[#allocation2 + $0x58] sm:$0xff]
      %v2065 = vld [vmem:[#allocation2 + $0x60] sm:$0xff]
      %v2066 = vld [vmem:[#allocation2 + $0x68] sm:$0xff]
      %v2067 = vld [vmem:[#allocation2 + $0x70] sm:$0xff]
      %v2068 = vld [vmem:[#allocation2 + $0x78] sm:$0xff]
      %v2069 = vadd.f32 %v2053, %v1944
      %v2070 = vadd.f32 %v2054, %v1947
      %v2071 = vadd.f32 %v2055, %v1952
      %v2072 = vadd.f32 %v2056, %v1955
      %v2073 = vadd.f32 %v2057, %v1960
      %v2074 = vadd.f32 %v2058, %v1963
      %v2075 = vadd.f32 %v2059, %v1968
      %v2076 = vadd.f32 %v2060, %v1971
      %v2077 = vadd.f32 %v2061, %v1976
      %v2078 = vadd.f32 %v2062, %v1979
      %v2079 = vadd.f32 %v2063, %v1984
      %v2080 = vadd.f32 %v2064, %v1987
      %v2081 = vadd.f32 %v2065, %v1992
      %v2082 = vadd.f32 %v2066, %v1995
      %v2083 = vadd.f32 %v2067, %v2000
      %v2084 = vadd.f32 %v2068, %v2003
      %2085 = vst [vmem:[#allocation2] sm:$0xff] %v2069
      %2086 = vst [vmem:[#allocation2 + $0x8] sm:$0xff] %v2070
      %2087 = vst [vmem:[#allocation2 + $0x10] sm:$0xff] %v2071
      %2088 = vst [vmem:[#allocation2 + $0x18] sm:$0xff] %v2072
      %2089 = vst [vmem:[#allocation2 + $0x20] sm:$0xff] %v2073
      %2090 = vst [vmem:[#allocation2 + $0x28] sm:$0xff] %v2074
      %2091 = vst [vmem:[#allocation2 + $0x30] sm:$0xff] %v2075
      %2092 = vst [vmem:[#allocation2 + $0x38] sm:$0xff] %v2076
      %2093 = vst [vmem:[#allocation2 + $0x40] sm:$0xff] %v2077
      %2094 = vst [vmem:[#allocation2 + $0x48] sm:$0xff] %v2078
      %2095 = vst [vmem:[#allocation2 + $0x50] sm:$0xff] %v2079
      %2096 = vst [vmem:[#allocation2 + $0x58] sm:$0xff] %v2080
      %2097 = vst [vmem:[#allocation2 + $0x60] sm:$0xff] %v2081
      %2098 = vst [vmem:[#allocation2 + $0x68] sm:$0xff] %v2082
      %2099 = vst [vmem:[#allocation2 + $0x70] sm:$0xff] %v2083
      %2100 = vst [vmem:[#allocation2 + $0x78] sm:$0xff] %v2084
    $region49: #{mlp_forward.1} parent=1 // pred_fallthru
      _
    // Predicated region
    $region50: #{mlp_forward.1} parent=1 // pred_check
      %p2101 = pneg %p2006
    $region51: #{mlp_forward.1} parent=1 // pred_check_branch
      %2103 = sbr.rel (%p2101) target = $region53
    $region52: #{mlp_forward.1} parent=1 // pred_region
      %v2104 = vld [vmem:[#allocation2] sm:$0xff]
      %v2105 = vld [vmem:[#allocation2 + $0x8] sm:$0xff]
      %v2106 = vld [vmem:[#allocation2 + $0x10] sm:$0xff]
      %v2107 = vld [vmem:[#allocation2 + $0x18] sm:$0xff]
      %v2108 = vld [vmem:[#allocation2 + $0x20] sm:$0xff]
      %v2109 = vld [vmem:[#allocation2 + $0x28] sm:$0xff]
      %v2110 = vld [vmem:[#allocation2 + $0x30] sm:$0xff]
      %v2111 = vld [vmem:[#allocation2 + $0x38] sm:$0xff]
      %v2112 = vld [vmem:[#allocation2 + $0x40] sm:$0xff]
      %v2113 = vld [vmem:[#allocation2 + $0x48] sm:$0xff]
      %v2114 = vld [vmem:[#allocation2 + $0x50] sm:$0xff]
      %v2115 = vld [vmem:[#allocation2 + $0x58] sm:$0xff]
      %v2116 = vld [vmem:[#allocation2 + $0x60] sm:$0xff]
      %v2117 = vld [vmem:[#allocation2 + $0x68] sm:$0xff]
      %v2118 = vld [vmem:[#allocation2 + $0x70] sm:$0xff]
      %v2119 = vld [vmem:[#allocation2 + $0x78] sm:$0xff]
      %2120 = vst [vmem:[%s7] sm:$0xff] %v2104
      %2121 = vst [vmem:[%s7 + $0x8] sm:$0xff] %v2105
      %2122 = vst [vmem:[%s7 + $0x10] sm:$0xff] %v2106
      %2123 = vst [vmem:[%s7 + $0x18] sm:$0xff] %v2107
      %2124 = vst [vmem:[%s7 + $0x20] sm:$0xff] %v2108
      %2125 = vst [vmem:[%s7 + $0x28] sm:$0xff] %v2109
      %2126 = vst [vmem:[%s7 + $0x30] sm:$0xff] %v2110
      %2127 = vst [vmem:[%s7 + $0x38] sm:$0xff] %v2111
      %2128 = vst [vmem:[%s7 + $0x40] sm:$0xff] %v2112
      %2129 = vst [vmem:[%s7 + $0x48] sm:$0xff] %v2113
      %2130 = vst [vmem:[%s7 + $0x50] sm:$0xff] %v2114
      %2131 = vst [vmem:[%s7 + $0x58] sm:$0xff] %v2115
      %2132 = vst [vmem:[%s7 + $0x60] sm:$0xff] %v2116
      %2133 = vst [vmem:[%s7 + $0x68] sm:$0xff] %v2117
      %2134 = vst [vmem:[%s7 + $0x70] sm:$0xff] %v2118
      %2135 = vst [vmem:[%s7 + $0x78] sm:$0xff] %v2119
    $region53: #{mlp_forward.1} parent=1 // pred_fallthru
      _
    // Predicated region
    $region54: #{mlp_forward.1} parent=1 // pred_check
      _
    $region55: #{mlp_forward.1} parent=1 // pred_check_branch
      %2137 = sbr.rel (0) target = $region57
    $region56: #{mlp_forward.1} parent=1 // pred_region
      _
    $region57: #{mlp_forward.1} parent=1 // pred_fallthru
      _
    // Predicated region
    $region58: #{mlp_forward.1} parent=1 // pred_check
      _
    $region59: #{mlp_forward.1} parent=1 // pred_check_branch
      %2139 = sbr.rel (0) target = $region61
    $region60: #{mlp_forward.1} parent=1 // pred_region
      _
    $region61: #{mlp_forward.1} parent=1 // pred_fallthru
      _
    %2140 = vsyncpa [#allocation4], 1
    %2141 = vsyncpa [#allocation6], 1

</llo_original>
